<compile_context>
chip_gen: v7x
topology: tpu7x:2x2x1
jax: 0.10.0
libtpu: 0.0.40
codegen_flags: <defaults>
</compile_context>

<pallas_src>
import functools

import jax
import jax.numpy as jnp
from jax import lax
from jax.experimental import pallas as pl
from jax.experimental.pallas import tpu as pltpu

LN_EPS = 1e-5  # PyTorch nn.LayerNorm default


def _round_up(x, m):
    return ((x + m - 1) // m) * m


def vae_kernel(
    # streamed inputs (batch-tiled)
    enc_in_ref, mask_ref, eps_ref,
    # encoder params (VMEM-resident)
    we1_ref, be1_ref, g1_ref, bt1_ref,
    we2_ref, be2_ref, g2_ref, bt2_ref,
    wmulv_ref, bmulv_ref,
    # decoder params (VMEM-resident)
    wd1z_ref, wd1m_ref, bd1_ref, dg1_ref, dbt1_ref,
    wd2_ref, bd2_ref, dg2_ref, dbt2_ref,
    wd3_ref, bd3_ref,
    # outputs (batch-tiled)
    xhat_ref, mulv_ref,
    *, latent_dim,
):
    def dot(a, w_ref):
        # MXU matmul: operands in the weight dtype (f32 or bf16), f32 accumulate.
        return jnp.dot(a.astype(w_ref.dtype), w_ref[...],
                       preferred_element_type=jnp.float32)

    def ln_relu(h, g_ref, b_ref):
        # One-pass LayerNorm: sum and sum-of-squares are independent reductions,
        # var = E[h^2] - mean^2 (biased, matching nn.LayerNorm). All f32.
        inv_n = 1.0 / h.shape[-1]
        s1 = jnp.sum(h, axis=-1, keepdims=True)
        s2 = jnp.sum(h * h, axis=-1, keepdims=True)
        mean = s1 * inv_n
        var = s2 * inv_n - mean * mean
        y = (h - mean) * lax.rsqrt(var + LN_EPS) * g_ref[...] + b_ref[...]
        return jnp.maximum(y, 0.0)

    enc_in = enc_in_ref[...]          # (Bt, 2D) = cat([x_tilde, mask]) built in wrapper
    m = mask_ref[...]                 # (Bt, D)

    # ---- encoder ----
    h = dot(enc_in, we1_ref) + be1_ref[...]
    h = ln_relu(h, g1_ref, bt1_ref)
    h = dot(h, we2_ref) + be2_ref[...]
    h = ln_relu(h, g2_ref, bt2_ref)

    # Fused latent head: one (H, 2L) matmul -> [mu | logvar].
    mulv = dot(h, wmulv_ref) + bmulv_ref[...]
    mu = mulv[:, :latent_dim]
    logvar = mulv[:, latent_dim:]

    # ---- reparameterize (f32, EUP exp) ----
    std = jnp.exp(0.5 * jnp.clip(logvar, -10.0, 10.0))
    z = mu + std * eps_ref[...]

    # ---- decoder ----
    # Split matmul emulates cat([z, mask], dim=1) exactly (see header note).
    d = dot(z, wd1z_ref) + dot(m, wd1m_ref) + bd1_ref[...]
    d = ln_relu(d, dg1_ref, dbt1_ref)
    d = dot(d, wd2_ref) + bd2_ref[...]
    d = ln_relu(d, dg2_ref, dbt2_ref)

    xhat_ref[...] = dot(d, wd3_ref) + bd3_ref[...]
    mulv_ref[...] = mulv              # lane-dense (Bt, 2L) slab, split in wrapper


_PARAM_ORDER = [
    "we1", "be1", "g1", "bt1",
    "we2", "be2", "g2", "bt2",
    "wmulv", "bmulv",
    "wd1z", "wd1m", "bd1", "dg1", "dbt1",
    "wd2", "bd2", "dg2", "dbt2",
    "wd3", "bd3",
]


def make_params(key, input_dim, hidden_dim, latent_dim, weight_dtype=jnp.float32):
    """Synthetic parameters. Matmul weights stored (in, out); optionally bf16.

    Biases / LayerNorm affine params stay f32 (VPU-side adds happen in f32)."""
    ks = iter(jax.random.split(key, 32))
    D, H, L = input_dim, hidden_dim, latent_dim

    def w(shape, s=0.1):
        return (s * jax.random.normal(next(ks), shape)).astype(weight_dtype)

    def b(shape, s=0.1):
        return (s * jax.random.normal(next(ks), shape)).astype(jnp.float32)

    return {
        # encoder: Linear(2D -> H) (cat(x, mask) formed in the wrapper)
        "we1": w((2 * D, H)), "be1": b((1, H)),
        "g1": jnp.ones((1, H), jnp.float32), "bt1": jnp.zeros((1, H), jnp.float32),
        "we2": w((H, H)), "be2": b((1, H)),
        "g2": jnp.ones((1, H), jnp.float32), "bt2": jnp.zeros((1, H), jnp.float32),
        # fused latent head: Linear(H -> 2L) == [fc_mu | fc_logvar]
        "wmulv": w((H, 2 * L)), "bmulv": b((1, 2 * L)),
        # decoder layer 1: Linear(L + D -> H), split into z-part / mask-part
        "wd1z": w((L, H)), "wd1m": w((D, H)), "bd1": b((1, H)),
        "dg1": jnp.ones((1, H), jnp.float32), "dbt1": jnp.zeros((1, H), jnp.float32),
        "wd2": w((H, H)), "bd2": b((1, H)),
        "dg2": jnp.ones((1, H), jnp.float32), "dbt2": jnp.zeros((1, H), jnp.float32),
        "wd3": w((H, D)), "bd3": b((1, D)),
    }


@functools.partial(jax.jit, static_argnames=("b_tile",))
def corruption_aware_vae_forward(x_tilde, mask, eps, params, *, b_tile=512):
    """Returns (x_hat, mu, logvar). Noise eps ~ N(0,1), shape (B, latent_dim)."""
    B, D = x_tilde.shape
    L = eps.shape[1]
    H = params["we2"].shape[0]

    # Encoder-layer-1 fusion: the concat lives in the wrapper (lane-dense, free).
    enc_in = jnp.concatenate([x_tilde, mask], axis=1)          # (B, 2D)

    # Batch tiling: multiple of 8 sublanes; pad batch to a whole number of tiles.
    # (Tile sizing budget easily fits v7x's 64 MiB VMEM: resident weights < 0.1 MiB,
    #  double-buffered activation stream ~ b_tile * 112 * 4 B * 2.)
    b_tile = _round_up(max(8, min(b_tile, _round_up(B, 8))), 8)
    B_pad = _round_up(B, b_tile)
    if B_pad != B:
        pad = ((0, B_pad - B), (0, 0))
        enc_in = jnp.pad(enc_in, pad)
        mask_p = jnp.pad(mask, pad)
        eps_p = jnp.pad(eps, pad)
    else:
        mask_p, eps_p = mask, eps
    nb = B_pad // b_tile

    param_list = [params[k] for k in _PARAM_ORDER]

    def act_spec(feat):
        return pl.BlockSpec((b_tile, feat), lambda i: (i, 0))

    # Constant index_map -> weights DMA'd once and kept VMEM-resident.
    resident = lambda p: pl.BlockSpec(p.shape, lambda i: (0, 0))

    in_specs = [act_spec(2 * D), act_spec(D), act_spec(L)] + [resident(p) for p in param_list]
    out_specs = (act_spec(D), act_spec(2 * L))
    out_shape = (
        jax.ShapeDtypeStruct((B_pad, D), jnp.float32),       # x_hat
        jax.ShapeDtypeStruct((B_pad, 2 * L), jnp.float32),   # mu | logvar slab
    )

    # Advisory cost hint for the XLA scheduler.
    flops = 2 * B_pad * (2 * D * H + H * H + H * 2 * L + L * H + D * H + H * H + H * D)
    transcendentals = B_pad * (L + 4)   # exp(0.5*logvar) + one rsqrt per LN per row
    bytes_accessed = 4 * (B_pad * (2 * D + D + L + D + 2 * L)) + sum(
        p.size * p.dtype.itemsize for p in param_list)

    kernel = functools.partial(vae_kernel, latent_dim=L)

    x_hat, mulv = pl.pallas_call(
        kernel,
        out_shape=out_shape,
        grid_spec=pltpu.PrefetchScalarGridSpec(
            num_scalar_prefetch=0,
            grid=(nb,),
            in_specs=in_specs,
            out_specs=out_specs,
        ),
        compiler_params=pltpu.CompilerParams(
            dimension_semantics=("parallel",),      # 2x on v7x dual-TC, neutral elsewhere
            vmem_limit_bytes=32 * 1024 * 1024,      # sized for v7x (64 MiB physical)
        ),
        cost_estimate=pl.CostEstimate(
            flops=flops,
            transcendentals=transcendentals,
            bytes_accessed=bytes_accessed,
        ),
    )(enc_in, mask_p, eps_p, *param_list)

    return x_hat[:B], mulv[:B, :L], mulv[:B, L:]


def reference_forward(x_tilde, mask, eps, params):
    """Pure-JAX f32 reference mirroring the PyTorch forward (same eps)."""
    f32 = lambda a: a.astype(jnp.float32)
    L = eps.shape[1]

    def ln(h, g, b):
        mu_ = jnp.mean(h, axis=-1, keepdims=True)
        var = jnp.mean((h - mu_) ** 2, axis=-1, keepdims=True)
        return (h - mu_) / jnp.sqrt(var + LN_EPS) * g + b

    enc_in = jnp.concatenate([x_tilde, mask], axis=1)
    h = enc_in @ f32(params["we1"]) + params["be1"]
    h = jnp.maximum(ln(h, params["g1"], params["bt1"]), 0.0)
    h = h @ f32(params["we2"]) + params["be2"]
    h = jnp.maximum(ln(h, params["g2"], params["bt2"]), 0.0)
    mulv = h @ f32(params["wmulv"]) + params["bmulv"]
    mu, logvar = mulv[:, :L], mulv[:, L:]
    std = jnp.exp(0.5 * jnp.clip(logvar, -10.0, 10.0))
    z = mu + std * eps
    d = z @ f32(params["wd1z"]) + mask @ f32(params["wd1m"]) + params["bd1"]
    d = jnp.maximum(ln(d, params["dg1"], params["dbt1"]), 0.0)
    d = d @ f32(params["wd2"]) + params["bd2"]
    d = jnp.maximum(ln(d, params["dg2"], params["dbt2"]), 0.0)
    x_hat = d @ f32(params["wd3"]) + params["bd3"]
    return x_hat, mu, logvar


if __name__ == "__main__":
    B, D, H, L = 128, 16, 64, 16  # batch, input_dim, hidden_dim, latent_dim

    key = jax.random.PRNGKey(0)
    k_x, k_m, k_eps = jax.random.split(key, 3)

    x_tilde = jax.random.normal(k_x, (B, D), jnp.float32)
    mask = (jax.random.uniform(k_m, (B, D)) > 0.3).astype(jnp.float32)
    eps = jax.random.normal(k_eps, (B, L), jnp.float32)  # reparameterization noise

    # ---- exact f32 path (matches the PyTorch module's numerics) ----
    params = make_params(jax.random.PRNGKey(42), D, H, L)
    x_hat, mu, logvar = corruption_aware_vae_forward(x_tilde, mask, eps, params, b_tile=32)
    jax.block_until_ready((x_hat, mu, logvar))

    rx, rm, rl = reference_forward(x_tilde, mask, eps, params)
    assert jnp.allclose(x_hat, rx, atol=1e-4, rtol=1e-4)
    assert jnp.allclose(mu, rm, atol=1e-4, rtol=1e-4)
    assert jnp.allclose(logvar, rl, atol=1e-4, rtol=1e-4)

    # ---- bf16-weight MXU path (perf review); looser tolerance by construction ----
    params_bf16 = make_params(jax.random.PRNGKey(42), D, H, L, weight_dtype=jnp.bfloat16)
    bx, bm, bl = corruption_aware_vae_forward(x_tilde, mask, eps, params_bf16, b_tile=32)
    jax.block_until_ready((bx, bm, bl))

    rbx, rbm, rbl = reference_forward(x_tilde, mask, eps, params_bf16)
    assert jnp.allclose(bx, rbx, atol=5e-2, rtol=5e-2)
    assert jnp.allclose(bm, rbm, atol=5e-2, rtol=5e-2)
    assert jnp.allclose(bl, rbl, atol=5e-2, rtol=5e-2)

    print("KERNEL_OK")
</pallas_src>

<mosaic_0001>
module attributes {stable_mosaic.version = 11 : i64} {
  func.func @vae_kernel(%arg0: i32, %arg1: memref<32x32xf32, #tpu.memory_space<vmem>>, %arg2: memref<32x16xf32, #tpu.memory_space<vmem>>, %arg3: memref<32x16xf32, #tpu.memory_space<vmem>>, %arg4: memref<32x64xf32, #tpu.memory_space<vmem>>, %arg5: memref<1x64xf32, #tpu.memory_space<vmem>>, %arg6: memref<1x64xf32, #tpu.memory_space<vmem>>, %arg7: memref<1x64xf32, #tpu.memory_space<vmem>>, %arg8: memref<64x64xf32, #tpu.memory_space<vmem>>, %arg9: memref<1x64xf32, #tpu.memory_space<vmem>>, %arg10: memref<1x64xf32, #tpu.memory_space<vmem>>, %arg11: memref<1x64xf32, #tpu.memory_space<vmem>>, %arg12: memref<64x32xf32, #tpu.memory_space<vmem>>, %arg13: memref<1x32xf32, #tpu.memory_space<vmem>>, %arg14: memref<16x64xf32, #tpu.memory_space<vmem>>, %arg15: memref<16x64xf32, #tpu.memory_space<vmem>>, %arg16: memref<1x64xf32, #tpu.memory_space<vmem>>, %arg17: memref<1x64xf32, #tpu.memory_space<vmem>>, %arg18: memref<1x64xf32, #tpu.memory_space<vmem>>, %arg19: memref<64x64xf32, #tpu.memory_space<vmem>>, %arg20: memref<1x64xf32, #tpu.memory_space<vmem>>, %arg21: memref<1x64xf32, #tpu.memory_space<vmem>>, %arg22: memref<1x64xf32, #tpu.memory_space<vmem>>, %arg23: memref<64x16xf32, #tpu.memory_space<vmem>>, %arg24: memref<1x16xf32, #tpu.memory_space<vmem>>, %arg25: memref<32x16xf32, #tpu.memory_space<vmem>>, %arg26: memref<32x32xf32, #tpu.memory_space<vmem>>) attributes {dimension_semantics = [#tpu.dimension_semantics<parallel>], iteration_bounds = array<i64: 4>, scalar_prefetch = 0 : i64, scratch_operands = 0 : i64, tpu.core_type = #tpu.core_type<tc>, window_params = [{transform_indices = @transform_0, window_bounds = array<i64: 32, 32>}, {transform_indices = @transform_1, window_bounds = array<i64: 32, 16>}, {transform_indices = @transform_2, window_bounds = array<i64: 32, 16>}, {pipeline_mode = #tpu.pipeline_mode<synchronous>, transform_indices = @transform_3, window_bounds = array<i64: 32, 64>}, {pipeline_mode = #tpu.pipeline_mode<synchronous>, transform_indices = @transform_4, window_bounds = array<i64: 1, 64>}, {pipeline_mode = #tpu.pipeline_mode<synchronous>, transform_indices = @transform_5, window_bounds = array<i64: 1, 64>}, {pipeline_mode = #tpu.pipeline_mode<synchronous>, transform_indices = @transform_6, window_bounds = array<i64: 1, 64>}, {pipeline_mode = #tpu.pipeline_mode<synchronous>, transform_indices = @transform_7, window_bounds = array<i64: 64, 64>}, {pipeline_mode = #tpu.pipeline_mode<synchronous>, transform_indices = @transform_8, window_bounds = array<i64: 1, 64>}, {pipeline_mode = #tpu.pipeline_mode<synchronous>, transform_indices = @transform_9, window_bounds = array<i64: 1, 64>}, {pipeline_mode = #tpu.pipeline_mode<synchronous>, transform_indices = @transform_10, window_bounds = array<i64: 1, 64>}, {pipeline_mode = #tpu.pipeline_mode<synchronous>, transform_indices = @transform_11, window_bounds = array<i64: 64, 32>}, {pipeline_mode = #tpu.pipeline_mode<synchronous>, transform_indices = @transform_12, window_bounds = array<i64: 1, 32>}, {pipeline_mode = #tpu.pipeline_mode<synchronous>, transform_indices = @transform_13, window_bounds = array<i64: 16, 64>}, {pipeline_mode = #tpu.pipeline_mode<synchronous>, transform_indices = @transform_14, window_bounds = array<i64: 16, 64>}, {pipeline_mode = #tpu.pipeline_mode<synchronous>, transform_indices = @transform_15, window_bounds = array<i64: 1, 64>}, {pipeline_mode = #tpu.pipeline_mode<synchronous>, transform_indices = @transform_16, window_bounds = array<i64: 1, 64>}, {pipeline_mode = #tpu.pipeline_mode<synchronous>, transform_indices = @transform_17, window_bounds = array<i64: 1, 64>}, {pipeline_mode = #tpu.pipeline_mode<synchronous>, transform_indices = @transform_18, window_bounds = array<i64: 64, 64>}, {pipeline_mode = #tpu.pipeline_mode<synchronous>, transform_indices = @transform_19, window_bounds = array<i64: 1, 64>}, {pipeline_mode = #tpu.pipeline_mode<synchronous>, transform_indices = @transform_20, window_bounds = array<i64: 1, 64>}, {pipeline_mode = #tpu.pipeline_mode<synchronous>, transform_indices = @transform_21, window_bounds = array<i64: 1, 64>}, {pipeline_mode = #tpu.pipeline_mode<synchronous>, transform_indices = @transform_22, window_bounds = array<i64: 64, 16>}, {pipeline_mode = #tpu.pipeline_mode<synchronous>, transform_indices = @transform_23, window_bounds = array<i64: 1, 16>}, {transform_indices = @transform_24, window_bounds = array<i64: 32, 16>}, {transform_indices = @transform_25, window_bounds = array<i64: 32, 32>}]} {
    %c0 = arith.constant 0 : index
    %c0_0 = arith.constant 0 : index
    %0 = vector.load %arg1[%c0, %c0_0] : memref<32x32xf32, #tpu.memory_space<vmem>>, vector<32x32xf32>
    %c0_1 = arith.constant 0 : index
    %c0_2 = arith.constant 0 : index
    %1 = vector.load %arg2[%c0_1, %c0_2] : memref<32x16xf32, #tpu.memory_space<vmem>>, vector<32x16xf32>
    %c0_3 = arith.constant 0 : index
    %c0_4 = arith.constant 0 : index
    %2 = vector.load %arg4[%c0_3, %c0_4] : memref<32x64xf32, #tpu.memory_space<vmem>>, vector<32x64xf32>
    %cst = arith.constant dense<0.000000e+00> : vector<32x64xf32>
    %3 = tpu.matmul %0, %2, %cst {dimension_numbers = #tpu.dot_dimension_numbers<[1], [0], [0], [1], [0, 0, 1, 1], [], []>} : vector<32x32xf32>, vector<32x64xf32>, vector<32x64xf32> -> vector<32x64xf32>
    %c0_5 = arith.constant 0 : index
    %c0_6 = arith.constant 0 : index
    %4 = vector.load %arg5[%c0_5, %c0_6] : memref<1x64xf32, #tpu.memory_space<vmem>>, vector<1x64xf32>
    %5 = vector.broadcast %4 : vector<1x64xf32> to vector<32x64xf32>
    %6 = arith.addf %3, %5 : vector<32x64xf32>
    %cst_7 = arith.constant dense<0.000000e+00> : vector<32xf32>
    %7 = vector.multi_reduction <add>, %6, %cst_7 [1] : vector<32x64xf32> to vector<32xf32>
    %8 = vector.shape_cast %7 : vector<32xf32> to vector<32x1xf32>
    %9 = arith.mulf %6, %6 : vector<32x64xf32>
    %cst_8 = arith.constant dense<0.000000e+00> : vector<32xf32>
    %10 = vector.multi_reduction <add>, %9, %cst_8 [1] : vector<32x64xf32> to vector<32xf32>
    %11 = vector.shape_cast %10 : vector<32xf32> to vector<32x1xf32>
    %cst_9 = arith.constant 1.562500e-02 : f32
    %12 = vector.broadcast %cst_9 : f32 to vector<32x1xf32>
    %13 = arith.mulf %8, %12 : vector<32x1xf32>
    %cst_10 = arith.constant 1.562500e-02 : f32
    %14 = vector.broadcast %cst_10 : f32 to vector<32x1xf32>
    %15 = arith.mulf %11, %14 : vector<32x1xf32>
    %16 = arith.mulf %13, %13 : vector<32x1xf32>
    %17 = arith.subf %15, %16 : vector<32x1xf32>
    %18 = vector.broadcast %13 : vector<32x1xf32> to vector<32x64xf32>
    %19 = arith.subf %6, %18 : vector<32x64xf32>
    %cst_11 = arith.constant 9.99999974E-6 : f32
    %20 = vector.broadcast %cst_11 : f32 to vector<32x1xf32>
    %21 = arith.addf %17, %20 : vector<32x1xf32>
    %22 = math.rsqrt %21 : vector<32x1xf32>
    %23 = vector.broadcast %22 : vector<32x1xf32> to vector<32x64xf32>
    %24 = arith.mulf %19, %23 : vector<32x64xf32>
    %c0_12 = arith.constant 0 : index
    %c0_13 = arith.constant 0 : index
    %25 = vector.load %arg6[%c0_12, %c0_13] : memref<1x64xf32, #tpu.memory_space<vmem>>, vector<1x64xf32>
    %26 = vector.broadcast %25 : vector<1x64xf32> to vector<32x64xf32>
    %27 = arith.mulf %24, %26 : vector<32x64xf32>
    %c0_14 = arith.constant 0 : index
    %c0_15 = arith.constant 0 : index
    %28 = vector.load %arg7[%c0_14, %c0_15] : memref<1x64xf32, #tpu.memory_space<vmem>>, vector<1x64xf32>
    %29 = vector.broadcast %28 : vector<1x64xf32> to vector<32x64xf32>
    %30 = arith.addf %27, %29 : vector<32x64xf32>
    %cst_16 = arith.constant 0.000000e+00 : f32
    %31 = vector.broadcast %cst_16 : f32 to vector<32x64xf32>
    %32 = arith.maximumf %30, %31 : vector<32x64xf32>
    %c0_17 = arith.constant 0 : index
    %c0_18 = arith.constant 0 : index
    %33 = vector.load %arg8[%c0_17, %c0_18] : memref<64x64xf32, #tpu.memory_space<vmem>>, vector<64x64xf32>
    %cst_19 = arith.constant dense<0.000000e+00> : vector<32x64xf32>
    %34 = tpu.matmul %32, %33, %cst_19 {dimension_numbers = #tpu.dot_dimension_numbers<[1], [0], [0], [1], [0, 0, 1, 1], [], []>} : vector<32x64xf32>, vector<64x64xf32>, vector<32x64xf32> -> vector<32x64xf32>
    %c0_20 = arith.constant 0 : index
    %c0_21 = arith.constant 0 : index
    %35 = vector.load %arg9[%c0_20, %c0_21] : memref<1x64xf32, #tpu.memory_space<vmem>>, vector<1x64xf32>
    %36 = vector.broadcast %35 : vector<1x64xf32> to vector<32x64xf32>
    %37 = arith.addf %34, %36 : vector<32x64xf32>
    %cst_22 = arith.constant dense<0.000000e+00> : vector<32xf32>
    %38 = vector.multi_reduction <add>, %37, %cst_22 [1] : vector<32x64xf32> to vector<32xf32>
    %39 = vector.shape_cast %38 : vector<32xf32> to vector<32x1xf32>
    %40 = arith.mulf %37, %37 : vector<32x64xf32>
    %cst_23 = arith.constant dense<0.000000e+00> : vector<32xf32>
    %41 = vector.multi_reduction <add>, %40, %cst_23 [1] : vector<32x64xf32> to vector<32xf32>
    %42 = vector.shape_cast %41 : vector<32xf32> to vector<32x1xf32>
    %cst_24 = arith.constant 1.562500e-02 : f32
    %43 = vector.broadcast %cst_24 : f32 to vector<32x1xf32>
    %44 = arith.mulf %39, %43 : vector<32x1xf32>
    %cst_25 = arith.constant 1.562500e-02 : f32
    %45 = vector.broadcast %cst_25 : f32 to vector<32x1xf32>
    %46 = arith.mulf %42, %45 : vector<32x1xf32>
    %47 = arith.mulf %44, %44 : vector<32x1xf32>
    %48 = arith.subf %46, %47 : vector<32x1xf32>
    %49 = vector.broadcast %44 : vector<32x1xf32> to vector<32x64xf32>
    %50 = arith.subf %37, %49 : vector<32x64xf32>
    %cst_26 = arith.constant 9.99999974E-6 : f32
    %51 = vector.broadcast %cst_26 : f32 to vector<32x1xf32>
    %52 = arith.addf %48, %51 : vector<32x1xf32>
    %53 = math.rsqrt %52 : vector<32x1xf32>
    %54 = vector.broadcast %53 : vector<32x1xf32> to vector<32x64xf32>
    %55 = arith.mulf %50, %54 : vector<32x64xf32>
    %c0_27 = arith.constant 0 : index
    %c0_28 = arith.constant 0 : index
    %56 = vector.load %arg10[%c0_27, %c0_28] : memref<1x64xf32, #tpu.memory_space<vmem>>, vector<1x64xf32>
    %57 = vector.broadcast %56 : vector<1x64xf32> to vector<32x64xf32>
    %58 = arith.mulf %55, %57 : vector<32x64xf32>
    %c0_29 = arith.constant 0 : index
    %c0_30 = arith.constant 0 : index
    %59 = vector.load %arg11[%c0_29, %c0_30] : memref<1x64xf32, #tpu.memory_space<vmem>>, vector<1x64xf32>
    %60 = vector.broadcast %59 : vector<1x64xf32> to vector<32x64xf32>
    %61 = arith.addf %58, %60 : vector<32x64xf32>
    %cst_31 = arith.constant 0.000000e+00 : f32
    %62 = vector.broadcast %cst_31 : f32 to vector<32x64xf32>
    %63 = arith.maximumf %61, %62 : vector<32x64xf32>
    %c0_32 = arith.constant 0 : index
    %c0_33 = arith.constant 0 : index
    %64 = vector.load %arg12[%c0_32, %c0_33] : memref<64x32xf32, #tpu.memory_space<vmem>>, vector<64x32xf32>
    %cst_34 = arith.constant dense<0.000000e+00> : vector<32x32xf32>
    %65 = tpu.matmul %63, %64, %cst_34 {dimension_numbers = #tpu.dot_dimension_numbers<[1], [0], [0], [1], [0, 0, 1, 1], [], []>} : vector<32x64xf32>, vector<64x32xf32>, vector<32x32xf32> -> vector<32x32xf32>
    %c0_35 = arith.constant 0 : index
    %c0_36 = arith.constant 0 : index
    %66 = vector.load %arg13[%c0_35, %c0_36] : memref<1x32xf32, #tpu.memory_space<vmem>>, vector<1x32xf32>
    %67 = vector.broadcast %66 : vector<1x32xf32> to vector<32x32xf32>
    %68 = arith.addf %65, %67 : vector<32x32xf32>
    %69 = vector.extract_strided_slice %68 {offsets = [0, 0], sizes = [32, 16], strides = [1, 1]} : vector<32x32xf32> to vector<32x16xf32>
    %70 = vector.extract_strided_slice %68 {offsets = [0, 16], sizes = [32, 16], strides = [1, 1]} : vector<32x32xf32> to vector<32x16xf32>
    %cst_37 = arith.constant -1.000000e+01 : f32
    %cst_38 = arith.constant 1.000000e+01 : f32
    %71 = vector.broadcast %cst_37 : f32 to vector<32x16xf32>
    %72 = arith.maximumf %71, %70 : vector<32x16xf32>
    %73 = vector.broadcast %cst_38 : f32 to vector<32x16xf32>
    %74 = arith.minimumf %73, %72 : vector<32x16xf32>
    %cst_39 = arith.constant 5.000000e-01 : f32
    %75 = vector.broadcast %cst_39 : f32 to vector<32x16xf32>
    %76 = arith.mulf %75, %74 : vector<32x16xf32>
    %77 = math.exp %76 : vector<32x16xf32>
    %c0_40 = arith.constant 0 : index
    %c0_41 = arith.constant 0 : index
    %78 = vector.load %arg3[%c0_40, %c0_41] : memref<32x16xf32, #tpu.memory_space<vmem>>, vector<32x16xf32>
    %79 = arith.mulf %77, %78 : vector<32x16xf32>
    %80 = arith.addf %69, %79 : vector<32x16xf32>
    %c0_42 = arith.constant 0 : index
    %c0_43 = arith.constant 0 : index
    %81 = vector.load %arg14[%c0_42, %c0_43] : memref<16x64xf32, #tpu.memory_space<vmem>>, vector<16x64xf32>
    %cst_44 = arith.constant dense<0.000000e+00> : vector<32x64xf32>
    %82 = tpu.matmul %80, %81, %cst_44 {dimension_numbers = #tpu.dot_dimension_numbers<[1], [0], [0], [1], [0, 0, 1, 1], [], []>} : vector<32x16xf32>, vector<16x64xf32>, vector<32x64xf32> -> vector<32x64xf32>
    %c0_45 = arith.constant 0 : index
    %c0_46 = arith.constant 0 : index
    %83 = vector.load %arg15[%c0_45, %c0_46] : memref<16x64xf32, #tpu.memory_space<vmem>>, vector<16x64xf32>
    %cst_47 = arith.constant dense<0.000000e+00> : vector<32x64xf32>
    %84 = tpu.matmul %1, %83, %cst_47 {dimension_numbers = #tpu.dot_dimension_numbers<[1], [0], [0], [1], [0, 0, 1, 1], [], []>} : vector<32x16xf32>, vector<16x64xf32>, vector<32x64xf32> -> vector<32x64xf32>
    %85 = arith.addf %82, %84 : vector<32x64xf32>
    %c0_48 = arith.constant 0 : index
    %c0_49 = arith.constant 0 : index
    %86 = vector.load %arg16[%c0_48, %c0_49] : memref<1x64xf32, #tpu.memory_space<vmem>>, vector<1x64xf32>
    %87 = vector.broadcast %86 : vector<1x64xf32> to vector<32x64xf32>
    %88 = arith.addf %85, %87 : vector<32x64xf32>
    %cst_50 = arith.constant dense<0.000000e+00> : vector<32xf32>
    %89 = vector.multi_reduction <add>, %88, %cst_50 [1] : vector<32x64xf32> to vector<32xf32>
    %90 = vector.shape_cast %89 : vector<32xf32> to vector<32x1xf32>
    %91 = arith.mulf %88, %88 : vector<32x64xf32>
    %cst_51 = arith.constant dense<0.000000e+00> : vector<32xf32>
    %92 = vector.multi_reduction <add>, %91, %cst_51 [1] : vector<32x64xf32> to vector<32xf32>
    %93 = vector.shape_cast %92 : vector<32xf32> to vector<32x1xf32>
    %cst_52 = arith.constant 1.562500e-02 : f32
    %94 = vector.broadcast %cst_52 : f32 to vector<32x1xf32>
    %95 = arith.mulf %90, %94 : vector<32x1xf32>
    %cst_53 = arith.constant 1.562500e-02 : f32
    %96 = vector.broadcast %cst_53 : f32 to vector<32x1xf32>
    %97 = arith.mulf %93, %96 : vector<32x1xf32>
    %98 = arith.mulf %95, %95 : vector<32x1xf32>
    %99 = arith.subf %97, %98 : vector<32x1xf32>
    %100 = vector.broadcast %95 : vector<32x1xf32> to vector<32x64xf32>
    %101 = arith.subf %88, %100 : vector<32x64xf32>
    %cst_54 = arith.constant 9.99999974E-6 : f32
    %102 = vector.broadcast %cst_54 : f32 to vector<32x1xf32>
    %103 = arith.addf %99, %102 : vector<32x1xf32>
    %104 = math.rsqrt %103 : vector<32x1xf32>
    %105 = vector.broadcast %104 : vector<32x1xf32> to vector<32x64xf32>
    %106 = arith.mulf %101, %105 : vector<32x64xf32>
    %c0_55 = arith.constant 0 : index
    %c0_56 = arith.constant 0 : index
    %107 = vector.load %arg17[%c0_55, %c0_56] : memref<1x64xf32, #tpu.memory_space<vmem>>, vector<1x64xf32>
    %108 = vector.broadcast %107 : vector<1x64xf32> to vector<32x64xf32>
    %109 = arith.mulf %106, %108 : vector<32x64xf32>
    %c0_57 = arith.constant 0 : index
    %c0_58 = arith.constant 0 : index
    %110 = vector.load %arg18[%c0_57, %c0_58] : memref<1x64xf32, #tpu.memory_space<vmem>>, vector<1x64xf32>
    %111 = vector.broadcast %110 : vector<1x64xf32> to vector<32x64xf32>
    %112 = arith.addf %109, %111 : vector<32x64xf32>
    %cst_59 = arith.constant 0.000000e+00 : f32
    %113 = vector.broadcast %cst_59 : f32 to vector<32x64xf32>
    %114 = arith.maximumf %112, %113 : vector<32x64xf32>
    %c0_60 = arith.constant 0 : index
    %c0_61 = arith.constant 0 : index
    %115 = vector.load %arg19[%c0_60, %c0_61] : memref<64x64xf32, #tpu.memory_space<vmem>>, vector<64x64xf32>
    %cst_62 = arith.constant dense<0.000000e+00> : vector<32x64xf32>
    %116 = tpu.matmul %114, %115, %cst_62 {dimension_numbers = #tpu.dot_dimension_numbers<[1], [0], [0], [1], [0, 0, 1, 1], [], []>} : vector<32x64xf32>, vector<64x64xf32>, vector<32x64xf32> -> vector<32x64xf32>
    %c0_63 = arith.constant 0 : index
    %c0_64 = arith.constant 0 : index
    %117 = vector.load %arg20[%c0_63, %c0_64] : memref<1x64xf32, #tpu.memory_space<vmem>>, vector<1x64xf32>
    %118 = vector.broadcast %117 : vector<1x64xf32> to vector<32x64xf32>
    %119 = arith.addf %116, %118 : vector<32x64xf32>
    %cst_65 = arith.constant dense<0.000000e+00> : vector<32xf32>
    %120 = vector.multi_reduction <add>, %119, %cst_65 [1] : vector<32x64xf32> to vector<32xf32>
    %121 = vector.shape_cast %120 : vector<32xf32> to vector<32x1xf32>
    %122 = arith.mulf %119, %119 : vector<32x64xf32>
    %cst_66 = arith.constant dense<0.000000e+00> : vector<32xf32>
    %123 = vector.multi_reduction <add>, %122, %cst_66 [1] : vector<32x64xf32> to vector<32xf32>
    %124 = vector.shape_cast %123 : vector<32xf32> to vector<32x1xf32>
    %cst_67 = arith.constant 1.562500e-02 : f32
    %125 = vector.broadcast %cst_67 : f32 to vector<32x1xf32>
    %126 = arith.mulf %121, %125 : vector<32x1xf32>
    %cst_68 = arith.constant 1.562500e-02 : f32
    %127 = vector.broadcast %cst_68 : f32 to vector<32x1xf32>
    %128 = arith.mulf %124, %127 : vector<32x1xf32>
    %129 = arith.mulf %126, %126 : vector<32x1xf32>
    %130 = arith.subf %128, %129 : vector<32x1xf32>
    %131 = vector.broadcast %126 : vector<32x1xf32> to vector<32x64xf32>
    %132 = arith.subf %119, %131 : vector<32x64xf32>
    %cst_69 = arith.constant 9.99999974E-6 : f32
    %133 = vector.broadcast %cst_69 : f32 to vector<32x1xf32>
    %134 = arith.addf %130, %133 : vector<32x1xf32>
    %135 = math.rsqrt %134 : vector<32x1xf32>
    %136 = vector.broadcast %135 : vector<32x1xf32> to vector<32x64xf32>
    %137 = arith.mulf %132, %136 : vector<32x64xf32>
    %c0_70 = arith.constant 0 : index
    %c0_71 = arith.constant 0 : index
    %138 = vector.load %arg21[%c0_70, %c0_71] : memref<1x64xf32, #tpu.memory_space<vmem>>, vector<1x64xf32>
    %139 = vector.broadcast %138 : vector<1x64xf32> to vector<32x64xf32>
    %140 = arith.mulf %137, %139 : vector<32x64xf32>
    %c0_72 = arith.constant 0 : index
    %c0_73 = arith.constant 0 : index
    %141 = vector.load %arg22[%c0_72, %c0_73] : memref<1x64xf32, #tpu.memory_space<vmem>>, vector<1x64xf32>
    %142 = vector.broadcast %141 : vector<1x64xf32> to vector<32x64xf32>
    %143 = arith.addf %140, %142 : vector<32x64xf32>
    %cst_74 = arith.constant 0.000000e+00 : f32
    %144 = vector.broadcast %cst_74 : f32 to vector<32x64xf32>
    %145 = arith.maximumf %143, %144 : vector<32x64xf32>
    %c0_75 = arith.constant 0 : index
    %c0_76 = arith.constant 0 : index
    %146 = vector.load %arg23[%c0_75, %c0_76] : memref<64x16xf32, #tpu.memory_space<vmem>>, vector<64x16xf32>
    %cst_77 = arith.constant dense<0.000000e+00> : vector<32x16xf32>
    %147 = tpu.matmul %145, %146, %cst_77 {dimension_numbers = #tpu.dot_dimension_numbers<[1], [0], [0], [1], [0, 0, 1, 1], [], []>} : vector<32x64xf32>, vector<64x16xf32>, vector<32x16xf32> -> vector<32x16xf32>
    %c0_78 = arith.constant 0 : index
    %c0_79 = arith.constant 0 : index
    %148 = vector.load %arg24[%c0_78, %c0_79] : memref<1x16xf32, #tpu.memory_space<vmem>>, vector<1x16xf32>
    %149 = vector.broadcast %148 : vector<1x16xf32> to vector<32x16xf32>
    %150 = arith.addf %147, %149 : vector<32x16xf32>
    %c0_80 = arith.constant 0 : index
    %c0_81 = arith.constant 0 : index
    %151 = vector.load %arg25[%c0_80, %c0_81] : memref<32x16xf32, #tpu.memory_space<vmem>>, vector<32x16xf32>
    tpu.vector_store %arg25[%c0_80, %c0_81], %150 {strides = array<i32>} : memref<32x16xf32, #tpu.memory_space<vmem>>, vector<32x16xf32>,
    %c0_82 = arith.constant 0 : index
    %c0_83 = arith.constant 0 : index
    %152 = vector.load %arg26[%c0_82, %c0_83] : memref<32x32xf32, #tpu.memory_space<vmem>>, vector<32x32xf32>
    tpu.vector_store %arg26[%c0_82, %c0_83], %68 {strides = array<i32>} : memref<32x32xf32, #tpu.memory_space<vmem>>, vector<32x32xf32>,
    return
  }
  func.func @transform_0(%arg0: i32) -> (i32, i32) {
    %c0_i32 = arith.constant 0 : i32
    %c0_i32_0 = arith.constant 0 : i32
    return %arg0, %c0_i32 : i32, i32
  }
  func.func @transform_1(%arg0: i32) -> (i32, i32) {
    %c0_i32 = arith.constant 0 : i32
    %c0_i32_0 = arith.constant 0 : i32
    return %arg0, %c0_i32 : i32, i32
  }
  func.func @transform_2(%arg0: i32) -> (i32, i32) {
    %c0_i32 = arith.constant 0 : i32
    %c0_i32_0 = arith.constant 0 : i32
    return %arg0, %c0_i32 : i32, i32
  }
  func.func @transform_3(%arg0: i32) -> (i32, i32) {
    %c0_i32 = arith.constant 0 : i32
    %c0_i32_0 = arith.constant 0 : i32
    %c0_i32_1 = arith.constant 0 : i32
    return %c0_i32, %c0_i32_0 : i32, i32
  }
  func.func @transform_4(%arg0: i32) -> (i32, i32) {
    %c0_i32 = arith.constant 0 : i32
    %c0_i32_0 = arith.constant 0 : i32
    %c0_i32_1 = arith.constant 0 : i32
    return %c0_i32, %c0_i32_0 : i32, i32
  }
  func.func @transform_5(%arg0: i32) -> (i32, i32) {
    %c0_i32 = arith.constant 0 : i32
    %c0_i32_0 = arith.constant 0 : i32
    %c0_i32_1 = arith.constant 0 : i32
    return %c0_i32, %c0_i32_0 : i32, i32
  }
  func.func @transform_6(%arg0: i32) -> (i32, i32) {
    %c0_i32 = arith.constant 0 : i32
    %c0_i32_0 = arith.constant 0 : i32
    %c0_i32_1 = arith.constant 0 : i32
    return %c0_i32, %c0_i32_0 : i32, i32
  }
  func.func @transform_7(%arg0: i32) -> (i32, i32) {
    %c0_i32 = arith.constant 0 : i32
    %c0_i32_0 = arith.constant 0 : i32
    %c0_i32_1 = arith.constant 0 : i32
    return %c0_i32, %c0_i32_0 : i32, i32
  }
  func.func @transform_8(%arg0: i32) -> (i32, i32) {
    %c0_i32 = arith.constant 0 : i32
    %c0_i32_0 = arith.constant 0 : i32
    %c0_i32_1 = arith.constant 0 : i32
    return %c0_i32, %c0_i32_0 : i32, i32
  }
  func.func @transform_9(%arg0: i32) -> (i32, i32) {
    %c0_i32 = arith.constant 0 : i32
    %c0_i32_0 = arith.constant 0 : i32
    %c0_i32_1 = arith.constant 0 : i32
    return %c0_i32, %c0_i32_0 : i32, i32
  }
  func.func @transform_10(%arg0: i32) -> (i32, i32) {
    %c0_i32 = arith.constant 0 : i32
    %c0_i32_0 = arith.constant 0 : i32
    %c0_i32_1 = arith.constant 0 : i32
    return %c0_i32, %c0_i32_0 : i32, i32
  }
  func.func @transform_11(%arg0: i32) -> (i32, i32) {
    %c0_i32 = arith.constant 0 : i32
    %c0_i32_0 = arith.constant 0 : i32
    %c0_i32_1 = arith.constant 0 : i32
    return %c0_i32, %c0_i32_0 : i32, i32
  }
  func.func @transform_12(%arg0: i32) -> (i32, i32) {
    %c0_i32 = arith.constant 0 : i32
    %c0_i32_0 = arith.constant 0 : i32
    %c0_i32_1 = arith.constant 0 : i32
    return %c0_i32, %c0_i32_0 : i32, i32
  }
  func.func @transform_13(%arg0: i32) -> (i32, i32) {
    %c0_i32 = arith.constant 0 : i32
    %c0_i32_0 = arith.constant 0 : i32
    %c0_i32_1 = arith.constant 0 : i32
    return %c0_i32, %c0_i32_0 : i32, i32
  }
  func.func @transform_14(%arg0: i32) -> (i32, i32) {
    %c0_i32 = arith.constant 0 : i32
    %c0_i32_0 = arith.constant 0 : i32
    %c0_i32_1 = arith.constant 0 : i32
    return %c0_i32, %c0_i32_0 : i32, i32
  }
  func.func @transform_15(%arg0: i32) -> (i32, i32) {
    %c0_i32 = arith.constant 0 : i32
    %c0_i32_0 = arith.constant 0 : i32
    %c0_i32_1 = arith.constant 0 : i32
    return %c0_i32, %c0_i32_0 : i32, i32
  }
  func.func @transform_16(%arg0: i32) -> (i32, i32) {
    %c0_i32 = arith.constant 0 : i32
    %c0_i32_0 = arith.constant 0 : i32
    %c0_i32_1 = arith.constant 0 : i32
    return %c0_i32, %c0_i32_0 : i32, i32
  }
  func.func @transform_17(%arg0: i32) -> (i32, i32) {
    %c0_i32 = arith.constant 0 : i32
    %c0_i32_0 = arith.constant 0 : i32
    %c0_i32_1 = arith.constant 0 : i32
    return %c0_i32, %c0_i32_0 : i32, i32
  }
  func.func @transform_18(%arg0: i32) -> (i32, i32) {
    %c0_i32 = arith.constant 0 : i32
    %c0_i32_0 = arith.constant 0 : i32
    %c0_i32_1 = arith.constant 0 : i32
    return %c0_i32, %c0_i32_0 : i32, i32
  }
  func.func @transform_19(%arg0: i32) -> (i32, i32) {
    %c0_i32 = arith.constant 0 : i32
    %c0_i32_0 = arith.constant 0 : i32
    %c0_i32_1 = arith.constant 0 : i32
    return %c0_i32, %c0_i32_0 : i32, i32
  }
  func.func @transform_20(%arg0: i32) -> (i32, i32) {
    %c0_i32 = arith.constant 0 : i32
    %c0_i32_0 = arith.constant 0 : i32
    %c0_i32_1 = arith.constant 0 : i32
    return %c0_i32, %c0_i32_0 : i32, i32
  }
  func.func @transform_21(%arg0: i32) -> (i32, i32) {
    %c0_i32 = arith.constant 0 : i32
    %c0_i32_0 = arith.constant 0 : i32
    %c0_i32_1 = arith.constant 0 : i32
    return %c0_i32, %c0_i32_0 : i32, i32
  }
  func.func @transform_22(%arg0: i32) -> (i32, i32) {
    %c0_i32 = arith.constant 0 : i32
    %c0_i32_0 = arith.constant 0 : i32
    %c0_i32_1 = arith.constant 0 : i32
    return %c0_i32, %c0_i32_0 : i32, i32
  }
  func.func @transform_23(%arg0: i32) -> (i32, i32) {
    %c0_i32 = arith.constant 0 : i32
    %c0_i32_0 = arith.constant 0 : i32
    %c0_i32_1 = arith.constant 0 : i32
    return %c0_i32, %c0_i32_0 : i32, i32
  }
  func.func @transform_24(%arg0: i32) -> (i32, i32) {
    %c0_i32 = arith.constant 0 : i32
    %c0_i32_0 = arith.constant 0 : i32
    return %arg0, %c0_i32 : i32, i32
  }
  func.func @transform_25(%arg0: i32) -> (i32, i32) {
    %c0_i32 = arith.constant 0 : i32
    %c0_i32_0 = arith.constant 0 : i32
    return %arg0, %c0_i32 : i32, i32
  }
}

</mosaic_0001>

<llo_original>
// kernel: corruption_aware_vae_forward.1
$region0: #{corruption_aware_vae_forward.1}
  #allocation0 [shape = 'u32[]', space=smem, size = 0x4, offset = 0x4, fixed_abs, tag = 'smem constant byte address 0x4 - core index']
  #allocation1 [shape = 'u32[144,128]{1,0:T(1,128)}', space=vmem, size = 0x12000, scoped, tag = 'internal scratch']
  %s0 = inlined_call_operand.vmem [shape: f32[128,32], index: 0, kind: input, shape index: {}]
  %s1 = inlined_call_operand.vmem [shape: f32[128,16], index: 1, kind: input, shape index: {}]
  %s2 = inlined_call_operand.vmem [shape: f32[128,16], index: 2, kind: input, shape index: {}]
  %s3 = inlined_call_operand.vmem [shape: f32[32,64], index: 3, kind: input, shape index: {}]
  %s4 = inlined_call_operand.vmem [shape: f32[1,64], index: 4, kind: input, shape index: {}]
  %s5 = inlined_call_operand.vmem [shape: f32[1,64], index: 5, kind: input, shape index: {}]
  %s6 = inlined_call_operand.vmem [shape: f32[1,64], index: 6, kind: input, shape index: {}]
  %s7 = inlined_call_operand.vmem [shape: f32[64,64], index: 7, kind: input, shape index: {}]
  %s8 = inlined_call_operand.vmem [shape: f32[1,64], index: 8, kind: input, shape index: {}]
  %s9 = inlined_call_operand.vmem [shape: f32[1,64], index: 9, kind: input, shape index: {}]
  %s10 = inlined_call_operand.vmem [shape: f32[1,64], index: 10, kind: input, shape index: {}]
  %s11 = inlined_call_operand.vmem [shape: f32[64,32], index: 11, kind: input, shape index: {}]
  %s12 = inlined_call_operand.vmem [shape: f32[1,32], index: 12, kind: input, shape index: {}]
  %s13 = inlined_call_operand.vmem [shape: f32[16,64], index: 13, kind: input, shape index: {}]
  %s14 = inlined_call_operand.vmem [shape: f32[16,64], index: 14, kind: input, shape index: {}]
  %s15 = inlined_call_operand.vmem [shape: f32[1,64], index: 15, kind: input, shape index: {}]
  %s16 = inlined_call_operand.vmem [shape: f32[1,64], index: 16, kind: input, shape index: {}]
  %s17 = inlined_call_operand.vmem [shape: f32[1,64], index: 17, kind: input, shape index: {}]
  %s18 = inlined_call_operand.vmem [shape: f32[64,64], index: 18, kind: input, shape index: {}]
  %s19 = inlined_call_operand.vmem [shape: f32[1,64], index: 19, kind: input, shape index: {}]
  %s20 = inlined_call_operand.vmem [shape: f32[1,64], index: 20, kind: input, shape index: {}]
  %s21 = inlined_call_operand.vmem [shape: f32[1,64], index: 21, kind: input, shape index: {}]
  %s22 = inlined_call_operand.vmem [shape: f32[64,16], index: 22, kind: input, shape index: {}]
  %s23 = inlined_call_operand.vmem [shape: f32[1,16], index: 23, kind: input, shape index: {}]
  %s24 = inlined_call_operand.vmem [shape: f32[128,16], index: 24, kind: output, shape index: {0}]
  %s25 = inlined_call_operand.vmem [shape: f32[128,32], index: 25, kind: output, shape index: {1}]
  %26 = xla_tuple %s24, %s25
  %s27 = sld [smem:[#allocation0]]
  $region137: #{corruption_aware_vae_forward.1} parent=0
    _
  %s29 = ssub.s32 1, %s27
  %s30 = scalar_select 0, %s29, %s27
  loop: start=0, step=1, limit=6
  $region2: #{corruption_aware_vae_forward.1} parent=0 // loop_pre_header
    _
  $region3: #{corruption_aware_vae_forward.1} parent=0 // loop_header
    %s32 = sphi 0, %s36
    %p33 = scmp.ge.s32.totalorder %s32, 6
    %s42 = sphi 0, %s44
    %s45 = sphi 0, %s42
    %s46 = sphi 0, %s45
    %s62 = sphi 0, %s46
    %s68 = sphi 0, %s70
    %s71 = sphi 0, %s68
    %s72 = sphi 0, %s71
    %s88 = sphi 0, %s72
    %s94 = sphi 0, %s96
    %s97 = sphi 0, %s94
    %s98 = sphi 0, %s97
    %s114 = sphi 0, %s98
    %s118 = sphi 0, %s118
    %s120 = sphi 0, %s118
    %s121 = sphi 0, %s120
    %s135 = sphi 0, %s121
    %s139 = sphi 0, %s139
    %s141 = sphi 0, %s139
    %s142 = sphi 0, %s141
    %s156 = sphi 0, %s142
    %s160 = sphi 0, %s160
    %s162 = sphi 0, %s160
    %s163 = sphi 0, %s162
    %s177 = sphi 0, %s163
    %s181 = sphi 0, %s181
    %s183 = sphi 0, %s181
    %s184 = sphi 0, %s183
    %s198 = sphi 0, %s184
    %s202 = sphi 0, %s202
    %s204 = sphi 0, %s202
    %s205 = sphi 0, %s204
    %s219 = sphi 0, %s205
    %s223 = sphi 0, %s223
    %s225 = sphi 0, %s223
    %s226 = sphi 0, %s225
    %s240 = sphi 0, %s226
    %s244 = sphi 0, %s244
    %s246 = sphi 0, %s244
    %s247 = sphi 0, %s246
    %s261 = sphi 0, %s247
    %s265 = sphi 0, %s265
    %s267 = sphi 0, %s265
    %s268 = sphi 0, %s267
    %s282 = sphi 0, %s268
    %s286 = sphi 0, %s286
    %s288 = sphi 0, %s286
    %s289 = sphi 0, %s288
    %s303 = sphi 0, %s289
    %s307 = sphi 0, %s307
    %s309 = sphi 0, %s307
    %s310 = sphi 0, %s309
    %s324 = sphi 0, %s310
    %s328 = sphi 0, %s328
    %s330 = sphi 0, %s328
    %s331 = sphi 0, %s330
    %s345 = sphi 0, %s331
    %s349 = sphi 0, %s349
    %s351 = sphi 0, %s349
    %s352 = sphi 0, %s351
    %s366 = sphi 0, %s352
    %s370 = sphi 0, %s370
    %s372 = sphi 0, %s370
    %s373 = sphi 0, %s372
    %s387 = sphi 0, %s373
    %s391 = sphi 0, %s391
    %s393 = sphi 0, %s391
    %s394 = sphi 0, %s393
    %s408 = sphi 0, %s394
    %s412 = sphi 0, %s412
    %s414 = sphi 0, %s412
    %s415 = sphi 0, %s414
    %s429 = sphi 0, %s415
    %s433 = sphi 0, %s433
    %s435 = sphi 0, %s433
    %s436 = sphi 0, %s435
    %s450 = sphi 0, %s436
    %s454 = sphi 0, %s454
    %s456 = sphi 0, %s454
    %s457 = sphi 0, %s456
    %s471 = sphi 0, %s457
    %s475 = sphi 0, %s475
    %s477 = sphi 0, %s475
    %s478 = sphi 0, %s477
    %s492 = sphi 0, %s478
    %s496 = sphi 0, %s496
    %s498 = sphi 0, %s496
    %s499 = sphi 0, %s498
    %s513 = sphi 0, %s499
    %s517 = sphi 0, %s517
    %s519 = sphi 0, %s517
    %s520 = sphi 0, %s519
    %s534 = sphi 0, %s520
    %s538 = sphi 0, %s538
    %s540 = sphi 0, %s538
    %s541 = sphi 0, %s540
    %s555 = sphi 0, %s541
    %s561 = sphi 0, %s563
    %s564 = sphi 0, %s561
    %s565 = sphi 0, %s564
    %s581 = sphi 0, %s565
    %s587 = sphi 0, %s589
    %s590 = sphi 0, %s587
    %s591 = sphi 0, %s590
    %s607 = sphi 0, %s591
  $region4: #{corruption_aware_vae_forward.1} parent=0 // loop_header_branch
    %35 = sbr.rel (%p33) target = $region8
  $region5: #{corruption_aware_vae_forward.1} parent=0 // loop_body
    %s37 = ssub.s32 %s32, 1
    %s38 = ssub.s32 %s32, 2
    %s39 = sadd.s32 %s32, 1
    %s40 = ssub.s32 %s32, %s39
    %p41 = scmp.eq.s32.totalorder %s40, 0
    %s43 = sadd.s32 %s42, 1
    %s44 = scalar_select %p41, %s42, %s43
    %p47 = pneg %p41
    %p48 = scmp.eq.s32.totalorder %s32, 3
    %p49 = por %p47, %p48
    %p50 = scmp.ne.s32.totalorder %s42, %s45
    %p51 = scmp.eq.s32.totalorder %s32, 0
    %p52 = por %p50, %p51
    %p53 = scmp.ne.s32.totalorder %s42, %s45
    %p54 = scmp.eq.s32.totalorder %s37, 3
    %p55 = por %p53, %p54
    %p56 = scmp.ne.s32.totalorder %s45, %s46
    %p57 = scmp.eq.s32.totalorder %s37, 0
    %p58 = por %p56, %p57
    %p59 = scmp.ne.s32.totalorder %s45, %s46
    %p60 = scmp.eq.s32.totalorder %s38, 3
    %p61 = por %p59, %p60
    %p63 = scmp.ne.s32.totalorder %s46, %s62
    %p64 = scmp.eq.s32.totalorder %s38, 0
    %p65 = por %p63, %p64
    %s66 = ssub.s32 %s32, %s39
    %p67 = scmp.eq.s32.totalorder %s66, 0
    %s69 = sadd.s32 %s68, 1
    %s70 = scalar_select %p67, %s68, %s69
    %p73 = pneg %p67
    %p74 = scmp.eq.s32.totalorder %s32, 3
    %p75 = por %p73, %p74
    %p76 = scmp.ne.s32.totalorder %s68, %s71
    %p77 = scmp.eq.s32.totalorder %s32, 0
    %p78 = por %p76, %p77
    %p79 = scmp.ne.s32.totalorder %s68, %s71
    %p80 = scmp.eq.s32.totalorder %s37, 3
    %p81 = por %p79, %p80
    %p82 = scmp.ne.s32.totalorder %s71, %s72
    %p83 = scmp.eq.s32.totalorder %s37, 0
    %p84 = por %p82, %p83
    %p85 = scmp.ne.s32.totalorder %s71, %s72
    %p86 = scmp.eq.s32.totalorder %s38, 3
    %p87 = por %p85, %p86
    %p89 = scmp.ne.s32.totalorder %s72, %s88
    %p90 = scmp.eq.s32.totalorder %s38, 0
    %p91 = por %p89, %p90
    %s92 = ssub.s32 %s32, %s39
    %p93 = scmp.eq.s32.totalorder %s92, 0
    %s95 = sadd.s32 %s94, 1
    %s96 = scalar_select %p93, %s94, %s95
    %p99 = pneg %p93
    %p100 = scmp.eq.s32.totalorder %s32, 3
    %p101 = por %p99, %p100
    %p102 = scmp.ne.s32.totalorder %s94, %s97
    %p103 = scmp.eq.s32.totalorder %s32, 0
    %p104 = por %p102, %p103
    %p105 = scmp.ne.s32.totalorder %s94, %s97
    %p106 = scmp.eq.s32.totalorder %s37, 3
    %p107 = por %p105, %p106
    %p108 = scmp.ne.s32.totalorder %s97, %s98
    %p109 = scmp.eq.s32.totalorder %s37, 0
    %p110 = por %p108, %p109
    %p111 = scmp.ne.s32.totalorder %s97, %s98
    %p112 = scmp.eq.s32.totalorder %s38, 3
    %p113 = por %p111, %p112
    %p115 = scmp.ne.s32.totalorder %s98, %s114
    %p116 = scmp.eq.s32.totalorder %s38, 0
    %p117 = por %p115, %p116
    %s119 = sadd.s32 %s118, 1
    %p122 = scmp.eq.s32.totalorder %s32, 3
    %p123 = scmp.ne.s32.totalorder %s118, %s120
    %p124 = scmp.eq.s32.totalorder %s32, 0
    %p125 = por %p123, %p124
    %p126 = scmp.ne.s32.totalorder %s118, %s120
    %p127 = scmp.eq.s32.totalorder %s37, 3
    %p128 = por %p126, %p127
    %p129 = scmp.ne.s32.totalorder %s120, %s121
    %p130 = scmp.eq.s32.totalorder %s37, 0
    %p131 = por %p129, %p130
    %p132 = scmp.ne.s32.totalorder %s120, %s121
    %p133 = scmp.eq.s32.totalorder %s38, 3
    %p134 = por %p132, %p133
    %p136 = scmp.ne.s32.totalorder %s121, %s135
    %p137 = scmp.eq.s32.totalorder %s38, 0
    %p138 = por %p136, %p137
    %s140 = sadd.s32 %s139, 1
    %p143 = scmp.eq.s32.totalorder %s32, 3
    %p144 = scmp.ne.s32.totalorder %s139, %s141
    %p145 = scmp.eq.s32.totalorder %s32, 0
    %p146 = por %p144, %p145
    %p147 = scmp.ne.s32.totalorder %s139, %s141
    %p148 = scmp.eq.s32.totalorder %s37, 3
    %p149 = por %p147, %p148
    %p150 = scmp.ne.s32.totalorder %s141, %s142
    %p151 = scmp.eq.s32.totalorder %s37, 0
    %p152 = por %p150, %p151
    %p153 = scmp.ne.s32.totalorder %s141, %s142
    %p154 = scmp.eq.s32.totalorder %s38, 3
    %p155 = por %p153, %p154
    %p157 = scmp.ne.s32.totalorder %s142, %s156
    %p158 = scmp.eq.s32.totalorder %s38, 0
    %p159 = por %p157, %p158
    %s161 = sadd.s32 %s160, 1
    %p164 = scmp.eq.s32.totalorder %s32, 3
    %p165 = scmp.ne.s32.totalorder %s160, %s162
    %p166 = scmp.eq.s32.totalorder %s32, 0
    %p167 = por %p165, %p166
    %p168 = scmp.ne.s32.totalorder %s160, %s162
    %p169 = scmp.eq.s32.totalorder %s37, 3
    %p170 = por %p168, %p169
    %p171 = scmp.ne.s32.totalorder %s162, %s163
    %p172 = scmp.eq.s32.totalorder %s37, 0
    %p173 = por %p171, %p172
    %p174 = scmp.ne.s32.totalorder %s162, %s163
    %p175 = scmp.eq.s32.totalorder %s38, 3
    %p176 = por %p174, %p175
    %p178 = scmp.ne.s32.totalorder %s163, %s177
    %p179 = scmp.eq.s32.totalorder %s38, 0
    %p180 = por %p178, %p179
    %s182 = sadd.s32 %s181, 1
    %p185 = scmp.eq.s32.totalorder %s32, 3
    %p186 = scmp.ne.s32.totalorder %s181, %s183
    %p187 = scmp.eq.s32.totalorder %s32, 0
    %p188 = por %p186, %p187
    %p189 = scmp.ne.s32.totalorder %s181, %s183
    %p190 = scmp.eq.s32.totalorder %s37, 3
    %p191 = por %p189, %p190
    %p192 = scmp.ne.s32.totalorder %s183, %s184
    %p193 = scmp.eq.s32.totalorder %s37, 0
    %p194 = por %p192, %p193
    %p195 = scmp.ne.s32.totalorder %s183, %s184
    %p196 = scmp.eq.s32.totalorder %s38, 3
    %p197 = por %p195, %p196
    %p199 = scmp.ne.s32.totalorder %s184, %s198
    %p200 = scmp.eq.s32.totalorder %s38, 0
    %p201 = por %p199, %p200
    %s203 = sadd.s32 %s202, 1
    %p206 = scmp.eq.s32.totalorder %s32, 3
    %p207 = scmp.ne.s32.totalorder %s202, %s204
    %p208 = scmp.eq.s32.totalorder %s32, 0
    %p209 = por %p207, %p208
    %p210 = scmp.ne.s32.totalorder %s202, %s204
    %p211 = scmp.eq.s32.totalorder %s37, 3
    %p212 = por %p210, %p211
    %p213 = scmp.ne.s32.totalorder %s204, %s205
    %p214 = scmp.eq.s32.totalorder %s37, 0
    %p215 = por %p213, %p214
    %p216 = scmp.ne.s32.totalorder %s204, %s205
    %p217 = scmp.eq.s32.totalorder %s38, 3
    %p218 = por %p216, %p217
    %p220 = scmp.ne.s32.totalorder %s205, %s219
    %p221 = scmp.eq.s32.totalorder %s38, 0
    %p222 = por %p220, %p221
    %s224 = sadd.s32 %s223, 1
    %p227 = scmp.eq.s32.totalorder %s32, 3
    %p228 = scmp.ne.s32.totalorder %s223, %s225
    %p229 = scmp.eq.s32.totalorder %s32, 0
    %p230 = por %p228, %p229
    %p231 = scmp.ne.s32.totalorder %s223, %s225
    %p232 = scmp.eq.s32.totalorder %s37, 3
    %p233 = por %p231, %p232
    %p234 = scmp.ne.s32.totalorder %s225, %s226
    %p235 = scmp.eq.s32.totalorder %s37, 0
    %p236 = por %p234, %p235
    %p237 = scmp.ne.s32.totalorder %s225, %s226
    %p238 = scmp.eq.s32.totalorder %s38, 3
    %p239 = por %p237, %p238
    %p241 = scmp.ne.s32.totalorder %s226, %s240
    %p242 = scmp.eq.s32.totalorder %s38, 0
    %p243 = por %p241, %p242
    %s245 = sadd.s32 %s244, 1
    %p248 = scmp.eq.s32.totalorder %s32, 3
    %p249 = scmp.ne.s32.totalorder %s244, %s246
    %p250 = scmp.eq.s32.totalorder %s32, 0
    %p251 = por %p249, %p250
    %p252 = scmp.ne.s32.totalorder %s244, %s246
    %p253 = scmp.eq.s32.totalorder %s37, 3
    %p254 = por %p252, %p253
    %p255 = scmp.ne.s32.totalorder %s246, %s247
    %p256 = scmp.eq.s32.totalorder %s37, 0
    %p257 = por %p255, %p256
    %p258 = scmp.ne.s32.totalorder %s246, %s247
    %p259 = scmp.eq.s32.totalorder %s38, 3
    %p260 = por %p258, %p259
    %p262 = scmp.ne.s32.totalorder %s247, %s261
    %p263 = scmp.eq.s32.totalorder %s38, 0
    %p264 = por %p262, %p263
    %s266 = sadd.s32 %s265, 1
    %p269 = scmp.eq.s32.totalorder %s32, 3
    %p270 = scmp.ne.s32.totalorder %s265, %s267
    %p271 = scmp.eq.s32.totalorder %s32, 0
    %p272 = por %p270, %p271
    %p273 = scmp.ne.s32.totalorder %s265, %s267
    %p274 = scmp.eq.s32.totalorder %s37, 3
    %p275 = por %p273, %p274
    %p276 = scmp.ne.s32.totalorder %s267, %s268
    %p277 = scmp.eq.s32.totalorder %s37, 0
    %p278 = por %p276, %p277
    %p279 = scmp.ne.s32.totalorder %s267, %s268
    %p280 = scmp.eq.s32.totalorder %s38, 3
    %p281 = por %p279, %p280
    %p283 = scmp.ne.s32.totalorder %s268, %s282
    %p284 = scmp.eq.s32.totalorder %s38, 0
    %p285 = por %p283, %p284
    %s287 = sadd.s32 %s286, 1
    %p290 = scmp.eq.s32.totalorder %s32, 3
    %p291 = scmp.ne.s32.totalorder %s286, %s288
    %p292 = scmp.eq.s32.totalorder %s32, 0
    %p293 = por %p291, %p292
    %p294 = scmp.ne.s32.totalorder %s286, %s288
    %p295 = scmp.eq.s32.totalorder %s37, 3
    %p296 = por %p294, %p295
    %p297 = scmp.ne.s32.totalorder %s288, %s289
    %p298 = scmp.eq.s32.totalorder %s37, 0
    %p299 = por %p297, %p298
    %p300 = scmp.ne.s32.totalorder %s288, %s289
    %p301 = scmp.eq.s32.totalorder %s38, 3
    %p302 = por %p300, %p301
    %p304 = scmp.ne.s32.totalorder %s289, %s303
    %p305 = scmp.eq.s32.totalorder %s38, 0
    %p306 = por %p304, %p305
    %s308 = sadd.s32 %s307, 1
    %p311 = scmp.eq.s32.totalorder %s32, 3
    %p312 = scmp.ne.s32.totalorder %s307, %s309
    %p313 = scmp.eq.s32.totalorder %s32, 0
    %p314 = por %p312, %p313
    %p315 = scmp.ne.s32.totalorder %s307, %s309
    %p316 = scmp.eq.s32.totalorder %s37, 3
    %p317 = por %p315, %p316
    %p318 = scmp.ne.s32.totalorder %s309, %s310
    %p319 = scmp.eq.s32.totalorder %s37, 0
    %p320 = por %p318, %p319
    %p321 = scmp.ne.s32.totalorder %s309, %s310
    %p322 = scmp.eq.s32.totalorder %s38, 3
    %p323 = por %p321, %p322
    %p325 = scmp.ne.s32.totalorder %s310, %s324
    %p326 = scmp.eq.s32.totalorder %s38, 0
    %p327 = por %p325, %p326
    %s329 = sadd.s32 %s328, 1
    %p332 = scmp.eq.s32.totalorder %s32, 3
    %p333 = scmp.ne.s32.totalorder %s328, %s330
    %p334 = scmp.eq.s32.totalorder %s32, 0
    %p335 = por %p333, %p334
    %p336 = scmp.ne.s32.totalorder %s328, %s330
    %p337 = scmp.eq.s32.totalorder %s37, 3
    %p338 = por %p336, %p337
    %p339 = scmp.ne.s32.totalorder %s330, %s331
    %p340 = scmp.eq.s32.totalorder %s37, 0
    %p341 = por %p339, %p340
    %p342 = scmp.ne.s32.totalorder %s330, %s331
    %p343 = scmp.eq.s32.totalorder %s38, 3
    %p344 = por %p342, %p343
    %p346 = scmp.ne.s32.totalorder %s331, %s345
    %p347 = scmp.eq.s32.totalorder %s38, 0
    %p348 = por %p346, %p347
    %s350 = sadd.s32 %s349, 1
    %p353 = scmp.eq.s32.totalorder %s32, 3
    %p354 = scmp.ne.s32.totalorder %s349, %s351
    %p355 = scmp.eq.s32.totalorder %s32, 0
    %p356 = por %p354, %p355
    %p357 = scmp.ne.s32.totalorder %s349, %s351
    %p358 = scmp.eq.s32.totalorder %s37, 3
    %p359 = por %p357, %p358
    %p360 = scmp.ne.s32.totalorder %s351, %s352
    %p361 = scmp.eq.s32.totalorder %s37, 0
    %p362 = por %p360, %p361
    %p363 = scmp.ne.s32.totalorder %s351, %s352
    %p364 = scmp.eq.s32.totalorder %s38, 3
    %p365 = por %p363, %p364
    %p367 = scmp.ne.s32.totalorder %s352, %s366
    %p368 = scmp.eq.s32.totalorder %s38, 0
    %p369 = por %p367, %p368
    %s371 = sadd.s32 %s370, 1
    %p374 = scmp.eq.s32.totalorder %s32, 3
    %p375 = scmp.ne.s32.totalorder %s370, %s372
    %p376 = scmp.eq.s32.totalorder %s32, 0
    %p377 = por %p375, %p376
    %p378 = scmp.ne.s32.totalorder %s370, %s372
    %p379 = scmp.eq.s32.totalorder %s37, 3
    %p380 = por %p378, %p379
    %p381 = scmp.ne.s32.totalorder %s372, %s373
    %p382 = scmp.eq.s32.totalorder %s37, 0
    %p383 = por %p381, %p382
    %p384 = scmp.ne.s32.totalorder %s372, %s373
    %p385 = scmp.eq.s32.totalorder %s38, 3
    %p386 = por %p384, %p385
    %p388 = scmp.ne.s32.totalorder %s373, %s387
    %p389 = scmp.eq.s32.totalorder %s38, 0
    %p390 = por %p388, %p389
    %s392 = sadd.s32 %s391, 1
    %p395 = scmp.eq.s32.totalorder %s32, 3
    %p396 = scmp.ne.s32.totalorder %s391, %s393
    %p397 = scmp.eq.s32.totalorder %s32, 0
    %p398 = por %p396, %p397
    %p399 = scmp.ne.s32.totalorder %s391, %s393
    %p400 = scmp.eq.s32.totalorder %s37, 3
    %p401 = por %p399, %p400
    %p402 = scmp.ne.s32.totalorder %s393, %s394
    %p403 = scmp.eq.s32.totalorder %s37, 0
    %p404 = por %p402, %p403
    %p405 = scmp.ne.s32.totalorder %s393, %s394
    %p406 = scmp.eq.s32.totalorder %s38, 3
    %p407 = por %p405, %p406
    %p409 = scmp.ne.s32.totalorder %s394, %s408
    %p410 = scmp.eq.s32.totalorder %s38, 0
    %p411 = por %p409, %p410
    %s413 = sadd.s32 %s412, 1
    %p416 = scmp.eq.s32.totalorder %s32, 3
    %p417 = scmp.ne.s32.totalorder %s412, %s414
    %p418 = scmp.eq.s32.totalorder %s32, 0
    %p419 = por %p417, %p418
    %p420 = scmp.ne.s32.totalorder %s412, %s414
    %p421 = scmp.eq.s32.totalorder %s37, 3
    %p422 = por %p420, %p421
    %p423 = scmp.ne.s32.totalorder %s414, %s415
    %p424 = scmp.eq.s32.totalorder %s37, 0
    %p425 = por %p423, %p424
    %p426 = scmp.ne.s32.totalorder %s414, %s415
    %p427 = scmp.eq.s32.totalorder %s38, 3
    %p428 = por %p426, %p427
    %p430 = scmp.ne.s32.totalorder %s415, %s429
    %p431 = scmp.eq.s32.totalorder %s38, 0
    %p432 = por %p430, %p431
    %s434 = sadd.s32 %s433, 1
    %p437 = scmp.eq.s32.totalorder %s32, 3
    %p438 = scmp.ne.s32.totalorder %s433, %s435
    %p439 = scmp.eq.s32.totalorder %s32, 0
    %p440 = por %p438, %p439
    %p441 = scmp.ne.s32.totalorder %s433, %s435
    %p442 = scmp.eq.s32.totalorder %s37, 3
    %p443 = por %p441, %p442
    %p444 = scmp.ne.s32.totalorder %s435, %s436
    %p445 = scmp.eq.s32.totalorder %s37, 0
    %p446 = por %p444, %p445
    %p447 = scmp.ne.s32.totalorder %s435, %s436
    %p448 = scmp.eq.s32.totalorder %s38, 3
    %p449 = por %p447, %p448
    %p451 = scmp.ne.s32.totalorder %s436, %s450
    %p452 = scmp.eq.s32.totalorder %s38, 0
    %p453 = por %p451, %p452
    %s455 = sadd.s32 %s454, 1
    %p458 = scmp.eq.s32.totalorder %s32, 3
    %p459 = scmp.ne.s32.totalorder %s454, %s456
    %p460 = scmp.eq.s32.totalorder %s32, 0
    %p461 = por %p459, %p460
    %p462 = scmp.ne.s32.totalorder %s454, %s456
    %p463 = scmp.eq.s32.totalorder %s37, 3
    %p464 = por %p462, %p463
    %p465 = scmp.ne.s32.totalorder %s456, %s457
    %p466 = scmp.eq.s32.totalorder %s37, 0
    %p467 = por %p465, %p466
    %p468 = scmp.ne.s32.totalorder %s456, %s457
    %p469 = scmp.eq.s32.totalorder %s38, 3
    %p470 = por %p468, %p469
    %p472 = scmp.ne.s32.totalorder %s457, %s471
    %p473 = scmp.eq.s32.totalorder %s38, 0
    %p474 = por %p472, %p473
    %s476 = sadd.s32 %s475, 1
    %p479 = scmp.eq.s32.totalorder %s32, 3
    %p480 = scmp.ne.s32.totalorder %s475, %s477
    %p481 = scmp.eq.s32.totalorder %s32, 0
    %p482 = por %p480, %p481
    %p483 = scmp.ne.s32.totalorder %s475, %s477
    %p484 = scmp.eq.s32.totalorder %s37, 3
    %p485 = por %p483, %p484
    %p486 = scmp.ne.s32.totalorder %s477, %s478
    %p487 = scmp.eq.s32.totalorder %s37, 0
    %p488 = por %p486, %p487
    %p489 = scmp.ne.s32.totalorder %s477, %s478
    %p490 = scmp.eq.s32.totalorder %s38, 3
    %p491 = por %p489, %p490
    %p493 = scmp.ne.s32.totalorder %s478, %s492
    %p494 = scmp.eq.s32.totalorder %s38, 0
    %p495 = por %p493, %p494
    %s497 = sadd.s32 %s496, 1
    %p500 = scmp.eq.s32.totalorder %s32, 3
    %p501 = scmp.ne.s32.totalorder %s496, %s498
    %p502 = scmp.eq.s32.totalorder %s32, 0
    %p503 = por %p501, %p502
    %p504 = scmp.ne.s32.totalorder %s496, %s498
    %p505 = scmp.eq.s32.totalorder %s37, 3
    %p506 = por %p504, %p505
    %p507 = scmp.ne.s32.totalorder %s498, %s499
    %p508 = scmp.eq.s32.totalorder %s37, 0
    %p509 = por %p507, %p508
    %p510 = scmp.ne.s32.totalorder %s498, %s499
    %p511 = scmp.eq.s32.totalorder %s38, 3
    %p512 = por %p510, %p511
    %p514 = scmp.ne.s32.totalorder %s499, %s513
    %p515 = scmp.eq.s32.totalorder %s38, 0
    %p516 = por %p514, %p515
    %s518 = sadd.s32 %s517, 1
    %p521 = scmp.eq.s32.totalorder %s32, 3
    %p522 = scmp.ne.s32.totalorder %s517, %s519
    %p523 = scmp.eq.s32.totalorder %s32, 0
    %p524 = por %p522, %p523
    %p525 = scmp.ne.s32.totalorder %s517, %s519
    %p526 = scmp.eq.s32.totalorder %s37, 3
    %p527 = por %p525, %p526
    %p528 = scmp.ne.s32.totalorder %s519, %s520
    %p529 = scmp.eq.s32.totalorder %s37, 0
    %p530 = por %p528, %p529
    %p531 = scmp.ne.s32.totalorder %s519, %s520
    %p532 = scmp.eq.s32.totalorder %s38, 3
    %p533 = por %p531, %p532
    %p535 = scmp.ne.s32.totalorder %s520, %s534
    %p536 = scmp.eq.s32.totalorder %s38, 0
    %p537 = por %p535, %p536
    %s539 = sadd.s32 %s538, 1
    %p542 = scmp.eq.s32.totalorder %s32, 3
    %p543 = scmp.ne.s32.totalorder %s538, %s540
    %p544 = scmp.eq.s32.totalorder %s32, 0
    %p545 = por %p543, %p544
    %p546 = scmp.ne.s32.totalorder %s538, %s540
    %p547 = scmp.eq.s32.totalorder %s37, 3
    %p548 = por %p546, %p547
    %p549 = scmp.ne.s32.totalorder %s540, %s541
    %p550 = scmp.eq.s32.totalorder %s37, 0
    %p551 = por %p549, %p550
    %p552 = scmp.ne.s32.totalorder %s540, %s541
    %p553 = scmp.eq.s32.totalorder %s38, 3
    %p554 = por %p552, %p553
    %p556 = scmp.ne.s32.totalorder %s541, %s555
    %p557 = scmp.eq.s32.totalorder %s38, 0
    %p558 = por %p556, %p557
    %s559 = ssub.s32 %s32, %s39
    %p560 = scmp.eq.s32.totalorder %s559, 0
    %s562 = sadd.s32 %s561, 1
    %s563 = scalar_select %p560, %s561, %s562
    %p566 = pneg %p560
    %p567 = scmp.eq.s32.totalorder %s32, 3
    %p568 = por %p566, %p567
    %p569 = scmp.ne.s32.totalorder %s561, %s564
    %p570 = scmp.eq.s32.totalorder %s32, 0
    %p571 = por %p569, %p570
    %p572 = scmp.ne.s32.totalorder %s561, %s564
    %p573 = scmp.eq.s32.totalorder %s37, 3
    %p574 = por %p572, %p573
    %p575 = scmp.ne.s32.totalorder %s564, %s565
    %p576 = scmp.eq.s32.totalorder %s37, 0
    %p577 = por %p575, %p576
    %p578 = scmp.ne.s32.totalorder %s564, %s565
    %p579 = scmp.eq.s32.totalorder %s38, 3
    %p580 = por %p578, %p579
    %p582 = scmp.ne.s32.totalorder %s565, %s581
    %p583 = scmp.eq.s32.totalorder %s38, 0
    %p584 = por %p582, %p583
    %s585 = ssub.s32 %s32, %s39
    %p586 = scmp.eq.s32.totalorder %s585, 0
    %s588 = sadd.s32 %s587, 1
    %s589 = scalar_select %p586, %s587, %s588
    %p592 = pneg %p586
    %p593 = scmp.eq.s32.totalorder %s32, 3
    %p594 = por %p592, %p593
    %p595 = scmp.ne.s32.totalorder %s587, %s590
    %p596 = scmp.eq.s32.totalorder %s32, 0
    %p597 = por %p595, %p596
    %p598 = scmp.ne.s32.totalorder %s587, %s590
    %p599 = scmp.eq.s32.totalorder %s37, 3
    %p600 = por %p598, %p599
    %p601 = scmp.ne.s32.totalorder %s590, %s591
    %p602 = scmp.eq.s32.totalorder %s37, 0
    %p603 = por %p601, %p602
    %p604 = scmp.ne.s32.totalorder %s590, %s591
    %p605 = scmp.eq.s32.totalorder %s38, 3
    %p606 = por %p604, %p605
    %p608 = scmp.ne.s32.totalorder %s591, %s607
    %p609 = scmp.eq.s32.totalorder %s38, 0
    %p610 = por %p608, %p609
    %p611 = scmp.le.s32.totalorder 1, %s32
    %p612 = scmp.lt.s32.totalorder %s32, 5
    %p613 = pnand %p611, %p612
    %p614 = pneg %p613
    // Predicated region
    $region9: #{corruption_aware_vae_forward.1} parent=5 // pred_check
      _
    $region10: #{corruption_aware_vae_forward.1} parent=5 // pred_check_branch
      %616 = sbr.rel (%p613) target = $region12
    $region11: #{corruption_aware_vae_forward.1} parent=5 // pred_region
      %s617 = ssub.s32 %s32, 1
      // Predicated region
      $region13: #{corruption_aware_vae_forward.1} parent=11 // pred_check
        %p618 = pneg %p131
      $region14: #{corruption_aware_vae_forward.1} parent=11 // pred_check_branch
        %620 = sbr.rel (%p618) target = $region16
      $region15: #{corruption_aware_vae_forward.1} parent=11 // pred_region
        _
      $region16: #{corruption_aware_vae_forward.1} parent=11 // pred_fallthru
        _
      // Predicated region
      $region17: #{corruption_aware_vae_forward.1} parent=11 // pred_check
        %p621 = pneg %p152
      $region18: #{corruption_aware_vae_forward.1} parent=11 // pred_check_branch
        %623 = sbr.rel (%p621) target = $region20
      $region19: #{corruption_aware_vae_forward.1} parent=11 // pred_region
        _
      $region20: #{corruption_aware_vae_forward.1} parent=11 // pred_fallthru
        _
      // Predicated region
      $region21: #{corruption_aware_vae_forward.1} parent=11 // pred_check
        %p624 = pneg %p173
      $region22: #{corruption_aware_vae_forward.1} parent=11 // pred_check_branch
        %626 = sbr.rel (%p624) target = $region24
      $region23: #{corruption_aware_vae_forward.1} parent=11 // pred_region
        _
      $region24: #{corruption_aware_vae_forward.1} parent=11 // pred_fallthru
        _
      // Predicated region
      $region25: #{corruption_aware_vae_forward.1} parent=11 // pred_check
        %p627 = pneg %p194
      $region26: #{corruption_aware_vae_forward.1} parent=11 // pred_check_branch
        %629 = sbr.rel (%p627) target = $region28
      $region27: #{corruption_aware_vae_forward.1} parent=11 // pred_region
        _
      $region28: #{corruption_aware_vae_forward.1} parent=11 // pred_fallthru
        _
      // Predicated region
      $region29: #{corruption_aware_vae_forward.1} parent=11 // pred_check
        %p630 = pneg %p215
      $region30: #{corruption_aware_vae_forward.1} parent=11 // pred_check_branch
        %632 = sbr.rel (%p630) target = $region32
      $region31: #{corruption_aware_vae_forward.1} parent=11 // pred_region
        _
      $region32: #{corruption_aware_vae_forward.1} parent=11 // pred_fallthru
        _
      // Predicated region
      $region33: #{corruption_aware_vae_forward.1} parent=11 // pred_check
        %p633 = pneg %p236
      $region34: #{corruption_aware_vae_forward.1} parent=11 // pred_check_branch
        %635 = sbr.rel (%p633) target = $region36
      $region35: #{corruption_aware_vae_forward.1} parent=11 // pred_region
        _
      $region36: #{corruption_aware_vae_forward.1} parent=11 // pred_fallthru
        _
      // Predicated region
      $region37: #{corruption_aware_vae_forward.1} parent=11 // pred_check
        %p636 = pneg %p257
      $region38: #{corruption_aware_vae_forward.1} parent=11 // pred_check_branch
        %638 = sbr.rel (%p636) target = $region40
      $region39: #{corruption_aware_vae_forward.1} parent=11 // pred_region
        _
      $region40: #{corruption_aware_vae_forward.1} parent=11 // pred_fallthru
        _
      // Predicated region
      $region41: #{corruption_aware_vae_forward.1} parent=11 // pred_check
        %p639 = pneg %p278
      $region42: #{corruption_aware_vae_forward.1} parent=11 // pred_check_branch
        %641 = sbr.rel (%p639) target = $region44
      $region43: #{corruption_aware_vae_forward.1} parent=11 // pred_region
        _
      $region44: #{corruption_aware_vae_forward.1} parent=11 // pred_fallthru
        _
      // Predicated region
      $region45: #{corruption_aware_vae_forward.1} parent=11 // pred_check
        %p642 = pneg %p299
      $region46: #{corruption_aware_vae_forward.1} parent=11 // pred_check_branch
        %644 = sbr.rel (%p642) target = $region48
      $region47: #{corruption_aware_vae_forward.1} parent=11 // pred_region
        _
      $region48: #{corruption_aware_vae_forward.1} parent=11 // pred_fallthru
        _
      // Predicated region
      $region49: #{corruption_aware_vae_forward.1} parent=11 // pred_check
        %p645 = pneg %p320
      $region50: #{corruption_aware_vae_forward.1} parent=11 // pred_check_branch
        %647 = sbr.rel (%p645) target = $region52
      $region51: #{corruption_aware_vae_forward.1} parent=11 // pred_region
        _
      $region52: #{corruption_aware_vae_forward.1} parent=11 // pred_fallthru
        _
      // Predicated region
      $region53: #{corruption_aware_vae_forward.1} parent=11 // pred_check
        %p648 = pneg %p341
      $region54: #{corruption_aware_vae_forward.1} parent=11 // pred_check_branch
        %650 = sbr.rel (%p648) target = $region56
      $region55: #{corruption_aware_vae_forward.1} parent=11 // pred_region
        _
      $region56: #{corruption_aware_vae_forward.1} parent=11 // pred_fallthru
        _
      // Predicated region
      $region57: #{corruption_aware_vae_forward.1} parent=11 // pred_check
        %p651 = pneg %p362
      $region58: #{corruption_aware_vae_forward.1} parent=11 // pred_check_branch
        %653 = sbr.rel (%p651) target = $region60
      $region59: #{corruption_aware_vae_forward.1} parent=11 // pred_region
        _
      $region60: #{corruption_aware_vae_forward.1} parent=11 // pred_fallthru
        _
      // Predicated region
      $region61: #{corruption_aware_vae_forward.1} parent=11 // pred_check
        %p654 = pneg %p383
      $region62: #{corruption_aware_vae_forward.1} parent=11 // pred_check_branch
        %656 = sbr.rel (%p654) target = $region64
      $region63: #{corruption_aware_vae_forward.1} parent=11 // pred_region
        _
      $region64: #{corruption_aware_vae_forward.1} parent=11 // pred_fallthru
        _
      // Predicated region
      $region65: #{corruption_aware_vae_forward.1} parent=11 // pred_check
        %p657 = pneg %p404
      $region66: #{corruption_aware_vae_forward.1} parent=11 // pred_check_branch
        %659 = sbr.rel (%p657) target = $region68
      $region67: #{corruption_aware_vae_forward.1} parent=11 // pred_region
        _
      $region68: #{corruption_aware_vae_forward.1} parent=11 // pred_fallthru
        _
      // Predicated region
      $region69: #{corruption_aware_vae_forward.1} parent=11 // pred_check
        %p660 = pneg %p425
      $region70: #{corruption_aware_vae_forward.1} parent=11 // pred_check_branch
        %662 = sbr.rel (%p660) target = $region72
      $region71: #{corruption_aware_vae_forward.1} parent=11 // pred_region
        _
      $region72: #{corruption_aware_vae_forward.1} parent=11 // pred_fallthru
        _
      // Predicated region
      $region73: #{corruption_aware_vae_forward.1} parent=11 // pred_check
        %p663 = pneg %p446
      $region74: #{corruption_aware_vae_forward.1} parent=11 // pred_check_branch
        %665 = sbr.rel (%p663) target = $region76
      $region75: #{corruption_aware_vae_forward.1} parent=11 // pred_region
        _
      $region76: #{corruption_aware_vae_forward.1} parent=11 // pred_fallthru
        _
      // Predicated region
      $region77: #{corruption_aware_vae_forward.1} parent=11 // pred_check
        %p666 = pneg %p467
      $region78: #{corruption_aware_vae_forward.1} parent=11 // pred_check_branch
        %668 = sbr.rel (%p666) target = $region80
      $region79: #{corruption_aware_vae_forward.1} parent=11 // pred_region
        _
      $region80: #{corruption_aware_vae_forward.1} parent=11 // pred_fallthru
        _
      // Predicated region
      $region81: #{corruption_aware_vae_forward.1} parent=11 // pred_check
        %p669 = pneg %p488
      $region82: #{corruption_aware_vae_forward.1} parent=11 // pred_check_branch
        %671 = sbr.rel (%p669) target = $region84
      $region83: #{corruption_aware_vae_forward.1} parent=11 // pred_region
        _
      $region84: #{corruption_aware_vae_forward.1} parent=11 // pred_fallthru
        _
      // Predicated region
      $region85: #{corruption_aware_vae_forward.1} parent=11 // pred_check
        %p672 = pneg %p509
      $region86: #{corruption_aware_vae_forward.1} parent=11 // pred_check_branch
        %674 = sbr.rel (%p672) target = $region88
      $region87: #{corruption_aware_vae_forward.1} parent=11 // pred_region
        _
      $region88: #{corruption_aware_vae_forward.1} parent=11 // pred_fallthru
        _
      // Predicated region
      $region89: #{corruption_aware_vae_forward.1} parent=11 // pred_check
        %p675 = pneg %p530
      $region90: #{corruption_aware_vae_forward.1} parent=11 // pred_check_branch
        %677 = sbr.rel (%p675) target = $region92
      $region91: #{corruption_aware_vae_forward.1} parent=11 // pred_region
        _
      $region92: #{corruption_aware_vae_forward.1} parent=11 // pred_fallthru
        _
      // Predicated region
      $region93: #{corruption_aware_vae_forward.1} parent=11 // pred_check
        %p678 = pneg %p551
      $region94: #{corruption_aware_vae_forward.1} parent=11 // pred_check_branch
        %680 = sbr.rel (%p678) target = $region96
      $region95: #{corruption_aware_vae_forward.1} parent=11 // pred_region
        _
      $region96: #{corruption_aware_vae_forward.1} parent=11 // pred_fallthru
        _
    $region12: #{corruption_aware_vae_forward.1} parent=5 // pred_fallthru
      _
    %p681 = scmp.lt.s32.totalorder %s32, 4
    // Predicated region
    $region97: #{corruption_aware_vae_forward.1} parent=5 // pred_check
      %p682 = pneg %p681
    $region98: #{corruption_aware_vae_forward.1} parent=5 // pred_check_branch
      %684 = sbr.rel (%p682) target = $region100
    $region99: #{corruption_aware_vae_forward.1} parent=5 // pred_region
      // Predicated region
      $region101: #{corruption_aware_vae_forward.1} parent=99 // pred_check
        %p685 = pneg %p52
      $region102: #{corruption_aware_vae_forward.1} parent=99 // pred_check_branch
        %687 = sbr.rel (%p685) target = $region104
      $region103: #{corruption_aware_vae_forward.1} parent=99 // pred_region
        %s688 = smul.u32 4, %s32
        %p689 = scmp.lt.s32.totalorder %s688, 15
        %s690 = scalar_select %p689, %s688, 15
        %s691 = smul.addr %s690, 8
        %s692 = scalar_lea.vmem %s0, %s691
        %s693 = smul.u32 4, %s32
      $region104: #{corruption_aware_vae_forward.1} parent=99 // pred_fallthru
        _
      // Predicated region
      $region105: #{corruption_aware_vae_forward.1} parent=99 // pred_check
        %p694 = pneg %p78
      $region106: #{corruption_aware_vae_forward.1} parent=99 // pred_check_branch
        %696 = sbr.rel (%p694) target = $region108
      $region107: #{corruption_aware_vae_forward.1} parent=99 // pred_region
        %s697 = smul.u32 4, %s32
        %p698 = scmp.lt.s32.totalorder %s697, 15
        %s699 = scalar_select %p698, %s697, 15
        %s700 = smul.addr %s699, 8
        %s701 = scalar_lea.vmem %s1, %s700
        %s702 = smul.u32 4, %s32
      $region108: #{corruption_aware_vae_forward.1} parent=99 // pred_fallthru
        _
      // Predicated region
      $region109: #{corruption_aware_vae_forward.1} parent=99 // pred_check
        %p703 = pneg %p104
      $region110: #{corruption_aware_vae_forward.1} parent=99 // pred_check_branch
        %705 = sbr.rel (%p703) target = $region112
      $region111: #{corruption_aware_vae_forward.1} parent=99 // pred_region
        %s706 = smul.u32 4, %s32
        %p707 = scmp.lt.s32.totalorder %s706, 15
        %s708 = scalar_select %p707, %s706, 15
        %s709 = smul.addr %s708, 8
        %s710 = scalar_lea.vmem %s2, %s709
        %s711 = smul.u32 4, %s32
      $region112: #{corruption_aware_vae_forward.1} parent=99 // pred_fallthru
        _
    $region100: #{corruption_aware_vae_forward.1} parent=5 // pred_fallthru
      _
    %p712 = scmp.le.s32.totalorder 1, %s32
    %p713 = scmp.lt.s32.totalorder %s32, 5
    %p714 = pnand %p712, %p713
    %p715 = pneg %p714
    // Predicated region
    $region113: #{corruption_aware_vae_forward.1} parent=5 // pred_check
      _
    $region114: #{corruption_aware_vae_forward.1} parent=5 // pred_check_branch
      %717 = sbr.rel (%p714) target = $region116
    $region115: #{corruption_aware_vae_forward.1} parent=5 // pred_region
      %s718 = ssub.s32 %s32, 1
      %s719 = smul.u32 4, %s37
      %p720 = scmp.lt.s32.totalorder %s719, 15
      %s721 = scalar_select %p720, %s719, 15
      %s722 = smul.addr %s721, 8
      %s723 = scalar_lea.vmem %s0, %s722
      %p724 = pneg %p58
      %p725 = pneg %p55
      %s726 = smul.u32 4, %s37
      %p727 = scmp.lt.s32.totalorder %s726, 15
      %s728 = scalar_select %p727, %s726, 15
      %s729 = smul.addr %s728, 8
      %s730 = scalar_lea.vmem %s1, %s729
      %p731 = pneg %p84
      %p732 = pneg %p81
      %s733 = smul.u32 4, %s37
      %p734 = scmp.lt.s32.totalorder %s733, 15
      %s735 = scalar_select %p734, %s733, 15
      %s736 = smul.addr %s735, 8
      %s737 = scalar_lea.vmem %s2, %s736
      %p738 = pneg %p110
      %p739 = pneg %p107
      %p740 = pneg %p131
      %p741 = pneg %p128
      %p742 = pneg %p152
      %p743 = pneg %p149
      %p744 = pneg %p173
      %p745 = pneg %p170
      %p746 = pneg %p194
      %p747 = pneg %p191
      %p748 = pneg %p215
      %p749 = pneg %p212
      %p750 = pneg %p236
      %p751 = pneg %p233
      %p752 = pneg %p257
      %p753 = pneg %p254
      %p754 = pneg %p278
      %p755 = pneg %p275
      %p756 = pneg %p299
      %p757 = pneg %p296
      %p758 = pneg %p320
      %p759 = pneg %p317
      %p760 = pneg %p341
      %p761 = pneg %p338
      %p762 = pneg %p362
      %p763 = pneg %p359
      %p764 = pneg %p383
      %p765 = pneg %p380
      %p766 = pneg %p404
      %p767 = pneg %p401
      %p768 = pneg %p425
      %p769 = pneg %p422
      %p770 = pneg %p446
      %p771 = pneg %p443
      %p772 = pneg %p467
      %p773 = pneg %p464
      %p774 = pneg %p488
      %p775 = pneg %p485
      %p776 = pneg %p509
      %p777 = pneg %p506
      %p778 = pneg %p530
      %p779 = pneg %p527
      %p780 = pneg %p551
      %p781 = pneg %p548
      %p782 = pneg %p577
      %p783 = pneg %p574
      %s784 = smul.u32 4, %s37
      %p785 = scmp.lt.s32.totalorder %s784, 15
      %s786 = scalar_select %p785, %s784, 15
      %s787 = smul.addr %s786, 8
      %s788 = scalar_lea.vmem %s24, %s787
      %p789 = pneg %p603
      %p790 = pneg %p600
      %s791 = smul.u32 4, %s37
      %p792 = scmp.lt.s32.totalorder %s791, 15
      %s793 = scalar_select %p792, %s791, 15
      %s794 = smul.addr %s793, 8
      %s795 = scalar_lea.vmem %s25, %s794
      %s796 = smul.u32 4, %s37
      %p797 = scmp.lt.s32.totalorder %s796, 15
      %s798 = scalar_select %p797, %s796, 15
      %s799 = smul.addr %s798, 8
      %s800 = scalar_lea.vmem %s0, %s799
      %s801 = smul.u32 4, %s37
      %s802 = smul.u32 4, %s37
      %p803 = scmp.lt.s32.totalorder %s802, 15
      %s804 = scalar_select %p803, %s802, 15
      %s805 = smul.addr %s804, 8
      %s806 = scalar_lea.vmem %s1, %s805
      %s807 = smul.u32 4, %s37
      %s808 = smul.u32 4, %s37
      %p809 = scmp.lt.s32.totalorder %s808, 15
      %s810 = scalar_select %p809, %s808, 15
      %s811 = smul.addr %s810, 8
      %s812 = scalar_lea.vmem %s2, %s811
      %s813 = smul.u32 4, %s37
      %s814 = smul.u32 4, %s37
      %p815 = scmp.lt.s32.totalorder %s814, 15
      %s816 = scalar_select %p815, %s814, 15
      %s817 = smul.addr %s816, 8
      %s818 = scalar_lea.vmem %s24, %s817
      %s819 = smul.u32 4, %s37
      %s820 = smul.u32 4, %s37
      %p821 = scmp.lt.s32.totalorder %s820, 15
      %s822 = scalar_select %p821, %s820, 15
      %s823 = smul.addr %s822, 8
      %s824 = scalar_lea.vmem %s25, %s823
      %s825 = smul.u32 4, %s37
      %v826 = vld [vmem:[%s800] sm:$0xff]
      %v827 = vld [vmem:[%s800 + $0x8] sm:$0xff]
      %v828 = vld [vmem:[%s800 + $0x10] sm:$0xff]
      %v829 = vld [vmem:[%s800 + $0x18] sm:$0xff]
      %v830 = vld [vmem:[%s806] sm:$0xff]
      %v831 = vld [vmem:[%s806 + $0x8] sm:$0xff]
      %v832 = vld [vmem:[%s806 + $0x10] sm:$0xff]
      %v833 = vld [vmem:[%s806 + $0x18] sm:$0xff]
      %v834 = vld [vmem:[%s3] sm:$0xff]
      %v835 = vld [vmem:[%s3 + $0x8] sm:$0xff]
      %v836 = vld [vmem:[%s3 + $0x10] sm:$0xff]
      %v837 = vld [vmem:[%s3 + $0x18] sm:$0xff]
      %v838 = vld [vmem:[%s4] sm:$0x1]
      %v840 = vlaneseq
      %v841 = vshrl.u32 %v840, 7
      %v842 = vsub.s32 0, %v841
      %v843 = vrot.slane %v838, %v842
      %vm845 = vcmask 261120
      %v847 = vsel %vm845, %v826, 0
      %v850 = vsel %vm845, %v827, 0
      %v853 = vsel %vm845, %v828, 0
      %v856 = vsel %vm845, %v829, 0
      %858 = vmatprep.subr.mxu0 0.0
      %859 = vmatpush1.msra.mxu0 %v834
      %860 = vmatprep.subr.mxu0 0.0
      %861 = vmatpush1.msra.mxu0 %v835
      %862 = vmatprep.subr.mxu0 0.0
      %863 = vmatpush1.msra.mxu0 %v836
      %864 = vmatprep.subr.mxu0 0.0
      %865 = vmatpush1.msra.mxu0 %v837
      %866 = vmatprep.subr.mxu0 0.0
      %867 = vmatpush1.msra.mxu0 0.0
      %868 = vmatprep.subr.mxu0 0.0
      %869 = vmatpush1.msra.mxu0 0.0
      %870 = vmatprep.subr.mxu0 0.0
      %871 = vmatpush1.msra.mxu0 0.0
      %872 = vmatprep.subr.mxu0 0.0
      %873 = vmatpush1.msra.mxu0 0.0
      %874 = vmatprep.subr.mxu0 0.0
      %875 = vmatpush1.msra.mxu0 0.0
      %876 = vmatprep.subr.mxu0 0.0
      %877 = vmatpush1.msra.mxu0 0.0
      %878 = vmatprep.subr.mxu0 0.0
      %879 = vmatpush1.msra.mxu0 0.0
      %880 = vmatprep.subr.mxu0 0.0
      %881 = vmatpush1.msra.mxu0 0.0
      %882 = vmatprep.subr.mxu0 0.0
      %883 = vmatpush1.msra.mxu0 0.0
      %884 = vmatprep.subr.mxu0 0.0
      %885 = vmatpush1.msra.mxu0 0.0
      %886 = vmatprep.subr.mxu0 0.0
      %887 = vmatpush1.msra.mxu0 0.0
      %888 = vmatprep.subr.mxu0 0.0
      %889 = vmatpush1.msra.mxu0 0.0
      %890 = vmatprep.subr.mxu0 0.0
      %891 = vmatpush1.msra.mxu0 0.0
      %892 = vmatprep.subr.mxu0 0.0
      %893 = vmatpush1.msra.mxu0 0.0
      %894 = vmatprep.subr.mxu0 0.0
      %895 = vmatpush1.msra.mxu0 0.0
      %896 = vmatprep.subr.mxu0 0.0
      %897 = vmatpush1.msra.mxu0 0.0
      %898 = vmatprep.subr.mxu0 0.0
      %899 = vmatpush1.msra.mxu0 0.0
      %900 = vmatprep.subr.mxu0 0.0
      %901 = vmatpush1.msra.mxu0 0.0
      %902 = vmatprep.subr.mxu0 0.0
      %903 = vmatpush1.msra.mxu0 0.0
      %904 = vmatprep.subr.mxu0 0.0
      %905 = vmatpush1.msra.mxu0 0.0
      %906 = vmatprep.subr.mxu0 0.0
      %907 = vmatpush1.msra.mxu0 0.0
      %908 = vmatprep.subr.mxu0 0.0
      %909 = vmatpush1.msra.mxu0 0.0
      %910 = vmatprep.subr.mxu0 0.0
      %911 = vmatpush1.msra.mxu0 0.0
      %912 = vmatprep.subr.mxu0 0.0
      %913 = vmatpush1.msra.mxu0 0.0
      %914 = vmatprep.subr.mxu0 0.0
      %915 = vmatpush1.msra.mxu0 0.0
      %916 = vmatprep.subr.mxu0 0.0
      %917 = vmatpush1.msra.mxu0 0.0
      %918 = vmatprep.subr.mxu0 0.0
      %919 = vmatpush1.msra.mxu0 0.0
      %920 = vmatprep.subr.mxu0 0.0
      %921 = vmatpush1.msra.mxu0 0.0
      %922 = vmatprep.mubr.f32.mxu0 0.0
      %923 = vmatmul.mubr.f32.gmra.mrb[0].mxu0 %v847
      %v924 = vpop.f32.mrb[0].mxu0
      %v925 = vadd.f32 %v843, %v924
      %v926 = vpop.f32.mrb[0].mxu0
      %927 = vmatprep.mubr.f32.mxu0 0.0
      %928 = vmatmul.mubr.f32.gmra.mrb[0].mxu0 %v850
      %v929 = vpop.f32.mrb[0].mxu0
      %v930 = vadd.f32 %v843, %v929
      %v931 = vpop.f32.mrb[0].mxu0
      %932 = vmatprep.mubr.f32.mxu0 0.0
      %933 = vmatmul.mubr.f32.gmra.mrb[0].mxu0 %v853
      %v934 = vpop.f32.mrb[0].mxu0
      %v935 = vadd.f32 %v843, %v934
      %v936 = vpop.f32.mrb[0].mxu0
      %937 = vmatprep.mubr.f32.mxu0 0.0
      %938 = vmatmul.mubr.f32.gmra.mrb[0].mxu0 %v856
      %v939 = vpop.f32.mrb[0].mxu0
      %v940 = vadd.f32 %v843, %v939
      %v941 = vpop.f32.mrb[0].mxu0
      %942 = vdwg.mxu0
      %vm943 = vcmask 523264
      %v944 = vsel %vm943, %v925, 0.0
      %945 = vadd.xlane.f32.xlu0 %v944
      %v946 = vpop.xlane.xlu0 %945
      %v947 = vsel %vm943, %v930, 0.0
      %948 = vadd.xlane.f32.xlu0 %v947
      %v949 = vpop.xlane.xlu0 %948
      %v950 = vsel %vm943, %v935, 0.0
      %951 = vadd.xlane.f32.xlu0 %v950
      %v952 = vpop.xlane.xlu0 %951
      %v953 = vsel %vm943, %v940, 0.0
      %954 = vadd.xlane.f32.xlu0 %v953
      %v955 = vpop.xlane.xlu0 %954
      %v956 = vmul.f32 %v925, %v925
      %v957 = vmul.f32 %v930, %v930
      %v958 = vmul.f32 %v935, %v935
      %v959 = vmul.f32 %v940, %v940
      %v960 = vsel %vm943, %v956, 0.0
      %961 = vadd.xlane.f32.xlu0 %v960
      %v962 = vpop.xlane.xlu0 %961
      %v963 = vsel %vm943, %v957, 0.0
      %964 = vadd.xlane.f32.xlu0 %v963
      %v965 = vpop.xlane.xlu0 %964
      %v966 = vsel %vm943, %v958, 0.0
      %967 = vadd.xlane.f32.xlu0 %v966
      %v968 = vpop.xlane.xlu0 %967
      %v969 = vsel %vm943, %v959, 0.0
      %970 = vadd.xlane.f32.xlu0 %v969
      %v971 = vpop.xlane.xlu0 %970
      %v972 = vmul.f32 %v946, 0.015625
      %v973 = vmul.f32 %v949, 0.015625
      %v974 = vmul.f32 %v952, 0.015625
      %v975 = vmul.f32 %v955, 0.015625
      %v976 = vmul.f32 %v962, 0.015625
      %v977 = vmul.f32 %v965, 0.015625
      %v978 = vmul.f32 %v968, 0.015625
      %v979 = vmul.f32 %v971, 0.015625
      %v980 = vmul.f32 %v972, %v972
      %v981 = vmul.f32 %v973, %v973
      %v982 = vmul.f32 %v974, %v974
      %v983 = vmul.f32 %v975, %v975
      %v984 = vsub.f32 %v976, %v980
      %v985 = vsub.f32 %v977, %v981
      %v986 = vsub.f32 %v978, %v982
      %v987 = vsub.f32 %v979, %v983
      %v988 = vsub.f32 %v925, %v972
      %v989 = vsub.f32 %v930, %v973
      %v990 = vsub.f32 %v935, %v974
      %v991 = vsub.f32 %v940, %v975
      %v992 = vadd.f32 %v984, 1e-05
      %v993 = vadd.f32 %v985, 1e-05
      %v994 = vadd.f32 %v986, 1e-05
      %v995 = vadd.f32 %v987, 1e-05
      %v996 = vrsqrt.pop %v992
      %v997 = vrsqrt.pop %v993
      %v998 = vrsqrt.pop %v994
      %v999 = vrsqrt.pop %v995
      %v1000 = vmul.f32 %v988, %v996
      %v1001 = vmul.f32 %v989, %v997
      %v1002 = vmul.f32 %v990, %v998
      %v1003 = vmul.f32 %v991, %v999
      %v1004 = vld [vmem:[%s5] sm:$0x1]
      %v1006 = vlaneseq
      %v1007 = vshrl.u32 %v1006, 7
      %v1008 = vsub.s32 0, %v1007
      %v1009 = vrot.slane %v1004, %v1008
      %v1011 = vmul.f32 %v1000, %v1009
      %v1012 = vmul.f32 %v1001, %v1009
      %v1013 = vmul.f32 %v1002, %v1009
      %v1014 = vmul.f32 %v1003, %v1009
      %v1015 = vld [vmem:[%s6] sm:$0x1]
      %v1017 = vlaneseq
      %v1018 = vshrl.u32 %v1017, 7
      %v1019 = vsub.s32 0, %v1018
      %v1020 = vrot.slane %v1015, %v1019
      %v1022 = vadd.f32 %v1011, %v1020
      %v1023 = vadd.f32 %v1012, %v1020
      %v1024 = vadd.f32 %v1013, %v1020
      %v1025 = vadd.f32 %v1014, %v1020
      %v1026 = vmax.f32 %v1022, 0.0
      %v1027 = vmax.f32 %v1023, 0.0
      %v1028 = vmax.f32 %v1024, 0.0
      %v1029 = vmax.f32 %v1025, 0.0
      %v1030 = vld [vmem:[%s7] sm:$0xff]
      %v1031 = vld [vmem:[%s7 + $0x8] sm:$0xff]
      %v1032 = vld [vmem:[%s7 + $0x10] sm:$0xff]
      %v1033 = vld [vmem:[%s7 + $0x18] sm:$0xff]
      %v1034 = vld [vmem:[%s7 + $0x20] sm:$0xff]
      %v1035 = vld [vmem:[%s7 + $0x28] sm:$0xff]
      %v1036 = vld [vmem:[%s7 + $0x30] sm:$0xff]
      %v1037 = vld [vmem:[%s7 + $0x38] sm:$0xff]
      %v1038 = vld [vmem:[%s8] sm:$0x1]
      %v1040 = vlaneseq
      %v1041 = vshrl.u32 %v1040, 7
      %v1042 = vsub.s32 0, %v1041
      %v1043 = vrot.slane %v1038, %v1042
      %v1046 = vsel %vm943, %v1026, 0
      %v1049 = vsel %vm943, %v1027, 0
      %v1052 = vsel %vm943, %v1028, 0
      %v1055 = vsel %vm943, %v1029, 0
      %1057 = vmatprep.subr.mxu0 0.0
      %1058 = vmatpush1.msra.mxu0 %v1030
      %1059 = vmatprep.subr.mxu0 0.0
      %1060 = vmatpush1.msra.mxu0 %v1031
      %1061 = vmatprep.subr.mxu0 0.0
      %1062 = vmatpush1.msra.mxu0 %v1032
      %1063 = vmatprep.subr.mxu0 0.0
      %1064 = vmatpush1.msra.mxu0 %v1033
      %1065 = vmatprep.subr.mxu0 0.0
      %1066 = vmatpush1.msra.mxu0 %v1034
      %1067 = vmatprep.subr.mxu0 0.0
      %1068 = vmatpush1.msra.mxu0 %v1035
      %1069 = vmatprep.subr.mxu0 0.0
      %1070 = vmatpush1.msra.mxu0 %v1036
      %1071 = vmatprep.subr.mxu0 0.0
      %1072 = vmatpush1.msra.mxu0 %v1037
      %1073 = vmatprep.subr.mxu0 0.0
      %1074 = vmatpush1.msra.mxu0 0.0
      %1075 = vmatprep.subr.mxu0 0.0
      %1076 = vmatpush1.msra.mxu0 0.0
      %1077 = vmatprep.subr.mxu0 0.0
      %1078 = vmatpush1.msra.mxu0 0.0
      %1079 = vmatprep.subr.mxu0 0.0
      %1080 = vmatpush1.msra.mxu0 0.0
      %1081 = vmatprep.subr.mxu0 0.0
      %1082 = vmatpush1.msra.mxu0 0.0
      %1083 = vmatprep.subr.mxu0 0.0
      %1084 = vmatpush1.msra.mxu0 0.0
      %1085 = vmatprep.subr.mxu0 0.0
      %1086 = vmatpush1.msra.mxu0 0.0
      %1087 = vmatprep.subr.mxu0 0.0
      %1088 = vmatpush1.msra.mxu0 0.0
      %1089 = vmatprep.subr.mxu0 0.0
      %1090 = vmatpush1.msra.mxu0 0.0
      %1091 = vmatprep.subr.mxu0 0.0
      %1092 = vmatpush1.msra.mxu0 0.0
      %1093 = vmatprep.subr.mxu0 0.0
      %1094 = vmatpush1.msra.mxu0 0.0
      %1095 = vmatprep.subr.mxu0 0.0
      %1096 = vmatpush1.msra.mxu0 0.0
      %1097 = vmatprep.subr.mxu0 0.0
      %1098 = vmatpush1.msra.mxu0 0.0
      %1099 = vmatprep.subr.mxu0 0.0
      %1100 = vmatpush1.msra.mxu0 0.0
      %1101 = vmatprep.subr.mxu0 0.0
      %1102 = vmatpush1.msra.mxu0 0.0
      %1103 = vmatprep.subr.mxu0 0.0
      %1104 = vmatpush1.msra.mxu0 0.0
      %1105 = vmatprep.subr.mxu0 0.0
      %1106 = vmatpush1.msra.mxu0 0.0
      %1107 = vmatprep.subr.mxu0 0.0
      %1108 = vmatpush1.msra.mxu0 0.0
      %1109 = vmatprep.subr.mxu0 0.0
      %1110 = vmatpush1.msra.mxu0 0.0
      %1111 = vmatprep.subr.mxu0 0.0
      %1112 = vmatpush1.msra.mxu0 0.0
      %1113 = vmatprep.subr.mxu0 0.0
      %1114 = vmatpush1.msra.mxu0 0.0
      %1115 = vmatprep.subr.mxu0 0.0
      %1116 = vmatpush1.msra.mxu0 0.0
      %1117 = vmatprep.subr.mxu0 0.0
      %1118 = vmatpush1.msra.mxu0 0.0
      %1119 = vmatprep.subr.mxu0 0.0
      %1120 = vmatpush1.msra.mxu0 0.0
      %1121 = vmatprep.mubr.f32.mxu0 0.0
      %1122 = vmatmul.mubr.f32.gmra.mrb[0].mxu0 %v1046
      %v1123 = vpop.f32.mrb[0].mxu0
      %v1124 = vadd.f32 %v1043, %v1123
      %v1125 = vpop.f32.mrb[0].mxu0
      %1126 = vmatprep.mubr.f32.mxu0 0.0
      %1127 = vmatmul.mubr.f32.gmra.mrb[0].mxu0 %v1049
      %v1128 = vpop.f32.mrb[0].mxu0
      %v1129 = vadd.f32 %v1043, %v1128
      %v1130 = vpop.f32.mrb[0].mxu0
      %1131 = vmatprep.mubr.f32.mxu0 0.0
      %1132 = vmatmul.mubr.f32.gmra.mrb[0].mxu0 %v1052
      %v1133 = vpop.f32.mrb[0].mxu0
      %v1134 = vadd.f32 %v1043, %v1133
      %v1135 = vpop.f32.mrb[0].mxu0
      %1136 = vmatprep.mubr.f32.mxu0 0.0
      %1137 = vmatmul.mubr.f32.gmra.mrb[0].mxu0 %v1055
      %v1138 = vpop.f32.mrb[0].mxu0
      %v1139 = vadd.f32 %v1043, %v1138
      %v1140 = vpop.f32.mrb[0].mxu0
      %1141 = vdwg.mxu0
      %v1142 = vsel %vm943, %v1124, 0.0
      %1143 = vadd.xlane.f32.xlu0 %v1142
      %v1144 = vpop.xlane.xlu0 %1143
      %v1145 = vsel %vm943, %v1129, 0.0
      %1146 = vadd.xlane.f32.xlu0 %v1145
      %v1147 = vpop.xlane.xlu0 %1146
      %v1148 = vsel %vm943, %v1134, 0.0
      %1149 = vadd.xlane.f32.xlu0 %v1148
      %v1150 = vpop.xlane.xlu0 %1149
      %v1151 = vsel %vm943, %v1139, 0.0
      %1152 = vadd.xlane.f32.xlu0 %v1151
      %v1153 = vpop.xlane.xlu0 %1152
      %v1154 = vmul.f32 %v1124, %v1124
      %v1155 = vmul.f32 %v1129, %v1129
      %v1156 = vmul.f32 %v1134, %v1134
      %v1157 = vmul.f32 %v1139, %v1139
      %v1158 = vsel %vm943, %v1154, 0.0
      %1159 = vadd.xlane.f32.xlu0 %v1158
      %v1160 = vpop.xlane.xlu0 %1159
      %v1161 = vsel %vm943, %v1155, 0.0
      %1162 = vadd.xlane.f32.xlu0 %v1161
      %v1163 = vpop.xlane.xlu0 %1162
      %v1164 = vsel %vm943, %v1156, 0.0
      %1165 = vadd.xlane.f32.xlu0 %v1164
      %v1166 = vpop.xlane.xlu0 %1165
      %v1167 = vsel %vm943, %v1157, 0.0
      %1168 = vadd.xlane.f32.xlu0 %v1167
      %v1169 = vpop.xlane.xlu0 %1168
      %v1170 = vmul.f32 %v1144, 0.015625
      %v1171 = vmul.f32 %v1147, 0.015625
      %v1172 = vmul.f32 %v1150, 0.015625
      %v1173 = vmul.f32 %v1153, 0.015625
      %v1174 = vmul.f32 %v1160, 0.015625
      %v1175 = vmul.f32 %v1163, 0.015625
      %v1176 = vmul.f32 %v1166, 0.015625
      %v1177 = vmul.f32 %v1169, 0.015625
      %v1178 = vmul.f32 %v1170, %v1170
      %v1179 = vmul.f32 %v1171, %v1171
      %v1180 = vmul.f32 %v1172, %v1172
      %v1181 = vmul.f32 %v1173, %v1173
      %v1182 = vsub.f32 %v1174, %v1178
      %v1183 = vsub.f32 %v1175, %v1179
      %v1184 = vsub.f32 %v1176, %v1180
      %v1185 = vsub.f32 %v1177, %v1181
      %v1186 = vsub.f32 %v1124, %v1170
      %v1187 = vsub.f32 %v1129, %v1171
      %v1188 = vsub.f32 %v1134, %v1172
      %v1189 = vsub.f32 %v1139, %v1173
      %v1190 = vadd.f32 %v1182, 1e-05
      %v1191 = vadd.f32 %v1183, 1e-05
      %v1192 = vadd.f32 %v1184, 1e-05
      %v1193 = vadd.f32 %v1185, 1e-05
      %v1194 = vrsqrt.pop %v1190
      %v1195 = vrsqrt.pop %v1191
      %v1196 = vrsqrt.pop %v1192
      %v1197 = vrsqrt.pop %v1193
      %v1198 = vmul.f32 %v1186, %v1194
      %v1199 = vmul.f32 %v1187, %v1195
      %v1200 = vmul.f32 %v1188, %v1196
      %v1201 = vmul.f32 %v1189, %v1197
      %v1202 = vld [vmem:[%s9] sm:$0x1]
      %v1204 = vlaneseq
      %v1205 = vshrl.u32 %v1204, 7
      %v1206 = vsub.s32 0, %v1205
      %v1207 = vrot.slane %v1202, %v1206
      %v1209 = vmul.f32 %v1198, %v1207
      %v1210 = vmul.f32 %v1199, %v1207
      %v1211 = vmul.f32 %v1200, %v1207
      %v1212 = vmul.f32 %v1201, %v1207
      %v1213 = vld [vmem:[%s10] sm:$0x1]
      %v1215 = vlaneseq
      %v1216 = vshrl.u32 %v1215, 7
      %v1217 = vsub.s32 0, %v1216
      %v1218 = vrot.slane %v1213, %v1217
      %v1220 = vadd.f32 %v1209, %v1218
      %v1221 = vadd.f32 %v1210, %v1218
      %v1222 = vadd.f32 %v1211, %v1218
      %v1223 = vadd.f32 %v1212, %v1218
      %v1224 = vmax.f32 %v1220, 0.0
      %v1225 = vmax.f32 %v1221, 0.0
      %v1226 = vmax.f32 %v1222, 0.0
      %v1227 = vmax.f32 %v1223, 0.0
      %v1228 = vld [vmem:[%s11] sm:$0xff]
      %v1229 = vld [vmem:[%s11 + $0x8] sm:$0xff]
      %v1230 = vld [vmem:[%s11 + $0x10] sm:$0xff]
      %v1231 = vld [vmem:[%s11 + $0x18] sm:$0xff]
      %v1232 = vld [vmem:[%s11 + $0x20] sm:$0xff]
      %v1233 = vld [vmem:[%s11 + $0x28] sm:$0xff]
      %v1234 = vld [vmem:[%s11 + $0x30] sm:$0xff]
      %v1235 = vld [vmem:[%s11 + $0x38] sm:$0xff]
      %v1236 = vld [vmem:[%s12] sm:$0x1]
      %v1238 = vlaneseq
      %v1239 = vshrl.u32 %v1238, 7
      %v1240 = vsub.s32 0, %v1239
      %v1241 = vrot.slane %v1236, %v1240
      %v1244 = vsel %vm943, %v1224, 0
      %v1247 = vsel %vm943, %v1225, 0
      %v1250 = vsel %vm943, %v1226, 0
      %v1253 = vsel %vm943, %v1227, 0
      %1255 = vmatprep.subr.mxu0 0.0
      %1256 = vmatpush1.msra.mxu0 %v1228
      %1257 = vmatprep.subr.mxu0 0.0
      %1258 = vmatpush1.msra.mxu0 %v1229
      %1259 = vmatprep.subr.mxu0 0.0
      %1260 = vmatpush1.msra.mxu0 %v1230
      %1261 = vmatprep.subr.mxu0 0.0
      %1262 = vmatpush1.msra.mxu0 %v1231
      %1263 = vmatprep.subr.mxu0 0.0
      %1264 = vmatpush1.msra.mxu0 %v1232
      %1265 = vmatprep.subr.mxu0 0.0
      %1266 = vmatpush1.msra.mxu0 %v1233
      %1267 = vmatprep.subr.mxu0 0.0
      %1268 = vmatpush1.msra.mxu0 %v1234
      %1269 = vmatprep.subr.mxu0 0.0
      %1270 = vmatpush1.msra.mxu0 %v1235
      %1271 = vmatprep.subr.mxu0 0.0
      %1272 = vmatpush1.msra.mxu0 0.0
      %1273 = vmatprep.subr.mxu0 0.0
      %1274 = vmatpush1.msra.mxu0 0.0
      %1275 = vmatprep.subr.mxu0 0.0
      %1276 = vmatpush1.msra.mxu0 0.0
      %1277 = vmatprep.subr.mxu0 0.0
      %1278 = vmatpush1.msra.mxu0 0.0
      %1279 = vmatprep.subr.mxu0 0.0
      %1280 = vmatpush1.msra.mxu0 0.0
      %1281 = vmatprep.subr.mxu0 0.0
      %1282 = vmatpush1.msra.mxu0 0.0
      %1283 = vmatprep.subr.mxu0 0.0
      %1284 = vmatpush1.msra.mxu0 0.0
      %1285 = vmatprep.subr.mxu0 0.0
      %1286 = vmatpush1.msra.mxu0 0.0
      %1287 = vmatprep.subr.mxu0 0.0
      %1288 = vmatpush1.msra.mxu0 0.0
      %1289 = vmatprep.subr.mxu0 0.0
      %1290 = vmatpush1.msra.mxu0 0.0
      %1291 = vmatprep.subr.mxu0 0.0
      %1292 = vmatpush1.msra.mxu0 0.0
      %1293 = vmatprep.subr.mxu0 0.0
      %1294 = vmatpush1.msra.mxu0 0.0
      %1295 = vmatprep.subr.mxu0 0.0
      %1296 = vmatpush1.msra.mxu0 0.0
      %1297 = vmatprep.subr.mxu0 0.0
      %1298 = vmatpush1.msra.mxu0 0.0
      %1299 = vmatprep.subr.mxu0 0.0
      %1300 = vmatpush1.msra.mxu0 0.0
      %1301 = vmatprep.subr.mxu0 0.0
      %1302 = vmatpush1.msra.mxu0 0.0
      %1303 = vmatprep.subr.mxu0 0.0
      %1304 = vmatpush1.msra.mxu0 0.0
      %1305 = vmatprep.subr.mxu0 0.0
      %1306 = vmatpush1.msra.mxu0 0.0
      %1307 = vmatprep.subr.mxu0 0.0
      %1308 = vmatpush1.msra.mxu0 0.0
      %1309 = vmatprep.subr.mxu0 0.0
      %1310 = vmatpush1.msra.mxu0 0.0
      %1311 = vmatprep.subr.mxu0 0.0
      %1312 = vmatpush1.msra.mxu0 0.0
      %1313 = vmatprep.subr.mxu0 0.0
      %1314 = vmatpush1.msra.mxu0 0.0
      %1315 = vmatprep.subr.mxu0 0.0
      %1316 = vmatpush1.msra.mxu0 0.0
      %1317 = vmatprep.subr.mxu0 0.0
      %1318 = vmatpush1.msra.mxu0 0.0
      %1319 = vmatprep.mubr.f32.mxu0 0.0
      %1320 = vmatmul.mubr.f32.gmra.mrb[0].mxu0 %v1244
      %v1321 = vpop.f32.mrb[0].mxu0
      %v1322 = vadd.f32 %v1241, %v1321
      %v1323 = vpop.f32.mrb[0].mxu0
      %1324 = vmatprep.mubr.f32.mxu0 0.0
      %1325 = vmatmul.mubr.f32.gmra.mrb[0].mxu0 %v1247
      %v1326 = vpop.f32.mrb[0].mxu0
      %v1327 = vadd.f32 %v1241, %v1326
      %v1328 = vpop.f32.mrb[0].mxu0
      %1329 = vmatprep.mubr.f32.mxu0 0.0
      %1330 = vmatmul.mubr.f32.gmra.mrb[0].mxu0 %v1250
      %v1331 = vpop.f32.mrb[0].mxu0
      %v1332 = vadd.f32 %v1241, %v1331
      %v1333 = vpop.f32.mrb[0].mxu0
      %1334 = vmatprep.mubr.f32.mxu0 0.0
      %1335 = vmatmul.mubr.f32.gmra.mrb[0].mxu0 %v1253
      %v1336 = vpop.f32.mrb[0].mxu0
      %v1337 = vadd.f32 %v1241, %v1336
      %v1338 = vpop.f32.mrb[0].mxu0
      %1339 = vdwg.mxu0
      %v1340 = vmax.f32 %v1322, -10.0
      %v1341 = vmax.f32 %v1327, -10.0
      %v1342 = vmax.f32 %v1332, -10.0
      %v1343 = vmax.f32 %v1337, -10.0
      %v1344 = vmin.f32 %v1340, 10.0
      %v1345 = vmin.f32 %v1341, 10.0
      %v1346 = vmin.f32 %v1342, 10.0
      %v1347 = vmin.f32 %v1343, 10.0
      %v1348 = vmul.f32 %v1344, 0.5
      %v1349 = vmul.f32 %v1345, 0.5
      %v1350 = vmul.f32 %v1346, 0.5
      %v1351 = vmul.f32 %v1347, 0.5
      %v1352 = vmul.f32 %v1348, 1.442695
      %v1353 = vpow.pop %v1352
      %v1354 = vmul.f32 %v1349, 1.442695
      %v1355 = vpow.pop %v1354
      %v1356 = vmul.f32 %v1350, 1.442695
      %v1357 = vpow.pop %v1356
      %v1358 = vmul.f32 %v1351, 1.442695
      %v1359 = vpow.pop %v1358
      %v1360 = vld [vmem:[%s812] sm:$0xff]
      %v1361 = vld [vmem:[%s812 + $0x8] sm:$0xff]
      %v1362 = vld [vmem:[%s812 + $0x10] sm:$0xff]
      %v1363 = vld [vmem:[%s812 + $0x18] sm:$0xff]
      %1368 = vrot.lane.b32.xlu0 %v1360, 16
      %v1369 = vpop.permute.xlu0 %1368
      %1370 = vrot.lane.b32.xlu0 %v1361, 16
      %v1371 = vpop.permute.xlu0 %1370
      %1372 = vrot.lane.b32.xlu0 %v1362, 16
      %v1373 = vpop.permute.xlu0 %1372
      %1374 = vrot.lane.b32.xlu0 %v1363, 16
      %v1375 = vpop.permute.xlu0 %1374
      %v1380 = vmul.f32 %v1353, %v1369
      %v1381 = vmul.f32 %v1355, %v1371
      %v1382 = vmul.f32 %v1357, %v1373
      %v1383 = vmul.f32 %v1359, %v1375
      %1388 = vrot.lane.b32.xlu0 %v1380, 112
      %v1389 = vpop.permute.xlu0 %1388
      %1390 = vrot.lane.b32.xlu0 %v1381, 112
      %v1391 = vpop.permute.xlu0 %1390
      %1392 = vrot.lane.b32.xlu0 %v1382, 112
      %v1393 = vpop.permute.xlu0 %1392
      %1394 = vrot.lane.b32.xlu0 %v1383, 112
      %v1395 = vpop.permute.xlu0 %1394
      %v1400 = vadd.f32 %v1322, %v1389
      %v1401 = vadd.f32 %v1327, %v1391
      %v1402 = vadd.f32 %v1332, %v1393
      %v1403 = vadd.f32 %v1337, %v1395
      %v1404 = vld [vmem:[%s13] sm:$0xff]
      %v1405 = vld [vmem:[%s13 + $0x8] sm:$0xff]
      %v1406 = vld [vmem:[%s14] sm:$0xff]
      %v1407 = vld [vmem:[%s14 + $0x8] sm:$0xff]
      %vm1408 = vcmask 130048
      %v1410 = vsel %vm1408, %v830, 0
      %v1413 = vsel %vm1408, %v831, 0
      %v1416 = vsel %vm1408, %v832, 0
      %v1419 = vsel %vm1408, %v833, 0
      %1421 = vmatprep.subr.mxu0 0.0
      %1422 = vmatpush1.msra.mxu0 %v1406
      %1423 = vmatprep.subr.mxu0 0.0
      %1424 = vmatpush1.msra.mxu0 %v1407
      %1425 = vmatprep.subr.mxu0 0.0
      %1426 = vmatpush1.msra.mxu0 0.0
      %1427 = vmatprep.subr.mxu0 0.0
      %1428 = vmatpush1.msra.mxu0 0.0
      %1429 = vmatprep.subr.mxu0 0.0
      %1430 = vmatpush1.msra.mxu0 0.0
      %1431 = vmatprep.subr.mxu0 0.0
      %1432 = vmatpush1.msra.mxu0 0.0
      %1433 = vmatprep.subr.mxu0 0.0
      %1434 = vmatpush1.msra.mxu0 0.0
      %1435 = vmatprep.subr.mxu0 0.0
      %1436 = vmatpush1.msra.mxu0 0.0
      %1437 = vmatprep.subr.mxu0 0.0
      %1438 = vmatpush1.msra.mxu0 0.0
      %1439 = vmatprep.subr.mxu0 0.0
      %1440 = vmatpush1.msra.mxu0 0.0
      %1441 = vmatprep.subr.mxu0 0.0
      %1442 = vmatpush1.msra.mxu0 0.0
      %1443 = vmatprep.subr.mxu0 0.0
      %1444 = vmatpush1.msra.mxu0 0.0
      %1445 = vmatprep.subr.mxu0 0.0
      %1446 = vmatpush1.msra.mxu0 0.0
      %1447 = vmatprep.subr.mxu0 0.0
      %1448 = vmatpush1.msra.mxu0 0.0
      %1449 = vmatprep.subr.mxu0 0.0
      %1450 = vmatpush1.msra.mxu0 0.0
      %1451 = vmatprep.subr.mxu0 0.0
      %1452 = vmatpush1.msra.mxu0 0.0
      %1453 = vmatprep.subr.mxu0 0.0
      %1454 = vmatpush1.msra.mxu0 0.0
      %1455 = vmatprep.subr.mxu0 0.0
      %1456 = vmatpush1.msra.mxu0 0.0
      %1457 = vmatprep.subr.mxu0 0.0
      %1458 = vmatpush1.msra.mxu0 0.0
      %1459 = vmatprep.subr.mxu0 0.0
      %1460 = vmatpush1.msra.mxu0 0.0
      %1461 = vmatprep.subr.mxu0 0.0
      %1462 = vmatpush1.msra.mxu0 0.0
      %1463 = vmatprep.subr.mxu0 0.0
      %1464 = vmatpush1.msra.mxu0 0.0
      %1465 = vmatprep.subr.mxu0 0.0
      %1466 = vmatpush1.msra.mxu0 0.0
      %1467 = vmatprep.subr.mxu0 0.0
      %1468 = vmatpush1.msra.mxu0 0.0
      %1469 = vmatprep.subr.mxu0 0.0
      %1470 = vmatpush1.msra.mxu0 0.0
      %1471 = vmatprep.subr.mxu0 0.0
      %1472 = vmatpush1.msra.mxu0 0.0
      %1473 = vmatprep.subr.mxu0 0.0
      %1474 = vmatpush1.msra.mxu0 0.0
      %1475 = vmatprep.subr.mxu0 0.0
      %1476 = vmatpush1.msra.mxu0 0.0
      %1477 = vmatprep.subr.mxu0 0.0
      %1478 = vmatpush1.msra.mxu0 0.0
      %1479 = vmatprep.subr.mxu0 0.0
      %1480 = vmatpush1.msra.mxu0 0.0
      %1481 = vmatprep.subr.mxu0 0.0
      %1482 = vmatpush1.msra.mxu0 0.0
      %1483 = vmatprep.subr.mxu0 0.0
      %1484 = vmatpush1.msra.mxu0 0.0
      %1485 = vmatprep.mubr.f32.mxu0 0.0
      %1486 = vmatmul.mubr.f32.gmra.mrb[0].mxu0 %v1410
      %v1487 = vpop.f32.mrb[0].mxu0
      %v1488 = vadd.f32 0.0, %v1487
      %v1489 = vpop.f32.mrb[0].mxu0
      %1490 = vmatprep.mubr.f32.mxu0 0.0
      %1491 = vmatmul.mubr.f32.gmra.mrb[0].mxu0 %v1413
      %v1492 = vpop.f32.mrb[0].mxu0
      %v1493 = vadd.f32 0.0, %v1492
      %v1494 = vpop.f32.mrb[0].mxu0
      %1495 = vmatprep.mubr.f32.mxu0 0.0
      %1496 = vmatmul.mubr.f32.gmra.mrb[0].mxu0 %v1416
      %v1497 = vpop.f32.mrb[0].mxu0
      %v1498 = vadd.f32 0.0, %v1497
      %v1499 = vpop.f32.mrb[0].mxu0
      %1500 = vmatprep.mubr.f32.mxu0 0.0
      %1501 = vmatmul.mubr.f32.gmra.mrb[0].mxu0 %v1419
      %v1502 = vpop.f32.mrb[0].mxu0
      %v1503 = vadd.f32 0.0, %v1502
      %v1504 = vpop.f32.mrb[0].mxu0
      %1505 = vdwg.mxu0
      %v1507 = vsel %vm1408, %v1400, 0
      %v1510 = vsel %vm1408, %v1401, 0
      %v1513 = vsel %vm1408, %v1402, 0
      %v1516 = vsel %vm1408, %v1403, 0
      %1518 = vmatprep.subr.mxu0 0.0
      %1519 = vmatpush1.msra.mxu0 %v1404
      %1520 = vmatprep.subr.mxu0 0.0
      %1521 = vmatpush1.msra.mxu0 %v1405
      %1522 = vmatprep.subr.mxu0 0.0
      %1523 = vmatpush1.msra.mxu0 0.0
      %1524 = vmatprep.subr.mxu0 0.0
      %1525 = vmatpush1.msra.mxu0 0.0
      %1526 = vmatprep.subr.mxu0 0.0
      %1527 = vmatpush1.msra.mxu0 0.0
      %1528 = vmatprep.subr.mxu0 0.0
      %1529 = vmatpush1.msra.mxu0 0.0
      %1530 = vmatprep.subr.mxu0 0.0
      %1531 = vmatpush1.msra.mxu0 0.0
      %1532 = vmatprep.subr.mxu0 0.0
      %1533 = vmatpush1.msra.mxu0 0.0
      %1534 = vmatprep.subr.mxu0 0.0
      %1535 = vmatpush1.msra.mxu0 0.0
      %1536 = vmatprep.subr.mxu0 0.0
      %1537 = vmatpush1.msra.mxu0 0.0
      %1538 = vmatprep.subr.mxu0 0.0
      %1539 = vmatpush1.msra.mxu0 0.0
      %1540 = vmatprep.subr.mxu0 0.0
      %1541 = vmatpush1.msra.mxu0 0.0
      %1542 = vmatprep.subr.mxu0 0.0
      %1543 = vmatpush1.msra.mxu0 0.0
      %1544 = vmatprep.subr.mxu0 0.0
      %1545 = vmatpush1.msra.mxu0 0.0
      %1546 = vmatprep.subr.mxu0 0.0
      %1547 = vmatpush1.msra.mxu0 0.0
      %1548 = vmatprep.subr.mxu0 0.0
      %1549 = vmatpush1.msra.mxu0 0.0
      %1550 = vmatprep.subr.mxu0 0.0
      %1551 = vmatpush1.msra.mxu0 0.0
      %1552 = vmatprep.subr.mxu0 0.0
      %1553 = vmatpush1.msra.mxu0 0.0
      %1554 = vmatprep.subr.mxu0 0.0
      %1555 = vmatpush1.msra.mxu0 0.0
      %1556 = vmatprep.subr.mxu0 0.0
      %1557 = vmatpush1.msra.mxu0 0.0
      %1558 = vmatprep.subr.mxu0 0.0
      %1559 = vmatpush1.msra.mxu0 0.0
      %1560 = vmatprep.subr.mxu0 0.0
      %1561 = vmatpush1.msra.mxu0 0.0
      %1562 = vmatprep.subr.mxu0 0.0
      %1563 = vmatpush1.msra.mxu0 0.0
      %1564 = vmatprep.subr.mxu0 0.0
      %1565 = vmatpush1.msra.mxu0 0.0
      %1566 = vmatprep.subr.mxu0 0.0
      %1567 = vmatpush1.msra.mxu0 0.0
      %1568 = vmatprep.subr.mxu0 0.0
      %1569 = vmatpush1.msra.mxu0 0.0
      %1570 = vmatprep.subr.mxu0 0.0
      %1571 = vmatpush1.msra.mxu0 0.0
      %1572 = vmatprep.subr.mxu0 0.0
      %1573 = vmatpush1.msra.mxu0 0.0
      %1574 = vmatprep.subr.mxu0 0.0
      %1575 = vmatpush1.msra.mxu0 0.0
      %1576 = vmatprep.subr.mxu0 0.0
      %1577 = vmatpush1.msra.mxu0 0.0
      %1578 = vmatprep.subr.mxu0 0.0
      %1579 = vmatpush1.msra.mxu0 0.0
      %1580 = vmatprep.subr.mxu0 0.0
      %1581 = vmatpush1.msra.mxu0 0.0
      %1582 = vmatprep.mubr.f32.mxu0 0.0
      %1583 = vmatmul.mubr.f32.gmra.mrb[0].mxu0 %v1507
      %v1584 = vpop.f32.mrb[0].mxu0
      %v1585 = vadd.f32 %v1488, %v1584
      %v1586 = vpop.f32.mrb[0].mxu0
      %1587 = vmatprep.mubr.f32.mxu0 0.0
      %1588 = vmatmul.mubr.f32.gmra.mrb[0].mxu0 %v1510
      %v1589 = vpop.f32.mrb[0].mxu0
      %v1590 = vadd.f32 %v1493, %v1589
      %v1591 = vpop.f32.mrb[0].mxu0
      %1592 = vmatprep.mubr.f32.mxu0 0.0
      %1593 = vmatmul.mubr.f32.gmra.mrb[0].mxu0 %v1513
      %v1594 = vpop.f32.mrb[0].mxu0
      %v1595 = vadd.f32 %v1498, %v1594
      %v1596 = vpop.f32.mrb[0].mxu0
      %1597 = vmatprep.mubr.f32.mxu0 0.0
      %1598 = vmatmul.mubr.f32.gmra.mrb[0].mxu0 %v1516
      %v1599 = vpop.f32.mrb[0].mxu0
      %v1600 = vadd.f32 %v1503, %v1599
      %v1601 = vpop.f32.mrb[0].mxu0
      %1602 = vdwg.mxu0
      %v1603 = vld [vmem:[%s15] sm:$0x1]
      %v1605 = vlaneseq
      %v1606 = vshrl.u32 %v1605, 7
      %v1607 = vsub.s32 0, %v1606
      %v1608 = vrot.slane %v1603, %v1607
      %v1610 = vadd.f32 %v1585, %v1608
      %v1611 = vadd.f32 %v1590, %v1608
      %v1612 = vadd.f32 %v1595, %v1608
      %v1613 = vadd.f32 %v1600, %v1608
      %v1614 = vsel %vm943, %v1610, 0.0
      %1615 = vadd.xlane.f32.xlu0 %v1614
      %v1616 = vpop.xlane.xlu0 %1615
      %v1617 = vsel %vm943, %v1611, 0.0
      %1618 = vadd.xlane.f32.xlu0 %v1617
      %v1619 = vpop.xlane.xlu0 %1618
      %v1620 = vsel %vm943, %v1612, 0.0
      %1621 = vadd.xlane.f32.xlu0 %v1620
      %v1622 = vpop.xlane.xlu0 %1621
      %v1623 = vsel %vm943, %v1613, 0.0
      %1624 = vadd.xlane.f32.xlu0 %v1623
      %v1625 = vpop.xlane.xlu0 %1624
      %v1626 = vmul.f32 %v1610, %v1610
      %v1627 = vmul.f32 %v1611, %v1611
      %v1628 = vmul.f32 %v1612, %v1612
      %v1629 = vmul.f32 %v1613, %v1613
      %v1630 = vsel %vm943, %v1626, 0.0
      %1631 = vadd.xlane.f32.xlu0 %v1630
      %v1632 = vpop.xlane.xlu0 %1631
      %v1633 = vsel %vm943, %v1627, 0.0
      %1634 = vadd.xlane.f32.xlu0 %v1633
      %v1635 = vpop.xlane.xlu0 %1634
      %v1636 = vsel %vm943, %v1628, 0.0
      %1637 = vadd.xlane.f32.xlu0 %v1636
      %v1638 = vpop.xlane.xlu0 %1637
      %v1639 = vsel %vm943, %v1629, 0.0
      %1640 = vadd.xlane.f32.xlu0 %v1639
      %v1641 = vpop.xlane.xlu0 %1640
      %v1642 = vmul.f32 %v1616, 0.015625
      %v1643 = vmul.f32 %v1619, 0.015625
      %v1644 = vmul.f32 %v1622, 0.015625
      %v1645 = vmul.f32 %v1625, 0.015625
      %v1646 = vmul.f32 %v1632, 0.015625
      %v1647 = vmul.f32 %v1635, 0.015625
      %v1648 = vmul.f32 %v1638, 0.015625
      %v1649 = vmul.f32 %v1641, 0.015625
      %v1650 = vmul.f32 %v1642, %v1642
      %v1651 = vmul.f32 %v1643, %v1643
      %v1652 = vmul.f32 %v1644, %v1644
      %v1653 = vmul.f32 %v1645, %v1645
      %v1654 = vsub.f32 %v1646, %v1650
      %v1655 = vsub.f32 %v1647, %v1651
      %v1656 = vsub.f32 %v1648, %v1652
      %v1657 = vsub.f32 %v1649, %v1653
      %v1658 = vsub.f32 %v1610, %v1642
      %v1659 = vsub.f32 %v1611, %v1643
      %v1660 = vsub.f32 %v1612, %v1644
      %v1661 = vsub.f32 %v1613, %v1645
      %v1662 = vadd.f32 %v1654, 1e-05
      %v1663 = vadd.f32 %v1655, 1e-05
      %v1664 = vadd.f32 %v1656, 1e-05
      %v1665 = vadd.f32 %v1657, 1e-05
      %v1666 = vrsqrt.pop %v1662
      %v1667 = vrsqrt.pop %v1663
      %v1668 = vrsqrt.pop %v1664
      %v1669 = vrsqrt.pop %v1665
      %v1670 = vmul.f32 %v1658, %v1666
      %v1671 = vmul.f32 %v1659, %v1667
      %v1672 = vmul.f32 %v1660, %v1668
      %v1673 = vmul.f32 %v1661, %v1669
      %v1674 = vld [vmem:[%s16] sm:$0x1]
      %v1676 = vlaneseq
      %v1677 = vshrl.u32 %v1676, 7
      %v1678 = vsub.s32 0, %v1677
      %v1679 = vrot.slane %v1674, %v1678
      %v1681 = vmul.f32 %v1670, %v1679
      %v1682 = vmul.f32 %v1671, %v1679
      %v1683 = vmul.f32 %v1672, %v1679
      %v1684 = vmul.f32 %v1673, %v1679
      %v1685 = vld [vmem:[%s17] sm:$0x1]
      %v1687 = vlaneseq
      %v1688 = vshrl.u32 %v1687, 7
      %v1689 = vsub.s32 0, %v1688
      %v1690 = vrot.slane %v1685, %v1689
      %v1692 = vadd.f32 %v1681, %v1690
      %v1693 = vadd.f32 %v1682, %v1690
      %v1694 = vadd.f32 %v1683, %v1690
      %v1695 = vadd.f32 %v1684, %v1690
      %v1696 = vmax.f32 %v1692, 0.0
      %v1697 = vmax.f32 %v1693, 0.0
      %v1698 = vmax.f32 %v1694, 0.0
      %v1699 = vmax.f32 %v1695, 0.0
      %v1700 = vld [vmem:[%s18] sm:$0xff]
      %v1701 = vld [vmem:[%s18 + $0x8] sm:$0xff]
      %v1702 = vld [vmem:[%s18 + $0x10] sm:$0xff]
      %v1703 = vld [vmem:[%s18 + $0x18] sm:$0xff]
      %v1704 = vld [vmem:[%s18 + $0x20] sm:$0xff]
      %v1705 = vld [vmem:[%s18 + $0x28] sm:$0xff]
      %v1706 = vld [vmem:[%s18 + $0x30] sm:$0xff]
      %v1707 = vld [vmem:[%s18 + $0x38] sm:$0xff]
      %v1708 = vld [vmem:[%s19] sm:$0x1]
      %v1710 = vlaneseq
      %v1711 = vshrl.u32 %v1710, 7
      %v1712 = vsub.s32 0, %v1711
      %v1713 = vrot.slane %v1708, %v1712
      %v1716 = vsel %vm943, %v1696, 0
      %v1719 = vsel %vm943, %v1697, 0
      %v1722 = vsel %vm943, %v1698, 0
      %v1725 = vsel %vm943, %v1699, 0
      %1727 = vmatprep.subr.mxu0 0.0
      %1728 = vmatpush1.msra.mxu0 %v1700
      %1729 = vmatprep.subr.mxu0 0.0
      %1730 = vmatpush1.msra.mxu0 %v1701
      %1731 = vmatprep.subr.mxu0 0.0
      %1732 = vmatpush1.msra.mxu0 %v1702
      %1733 = vmatprep.subr.mxu0 0.0
      %1734 = vmatpush1.msra.mxu0 %v1703
      %1735 = vmatprep.subr.mxu0 0.0
      %1736 = vmatpush1.msra.mxu0 %v1704
      %1737 = vmatprep.subr.mxu0 0.0
      %1738 = vmatpush1.msra.mxu0 %v1705
      %1739 = vmatprep.subr.mxu0 0.0
      %1740 = vmatpush1.msra.mxu0 %v1706
      %1741 = vmatprep.subr.mxu0 0.0
      %1742 = vmatpush1.msra.mxu0 %v1707
      %1743 = vmatprep.subr.mxu0 0.0
      %1744 = vmatpush1.msra.mxu0 0.0
      %1745 = vmatprep.subr.mxu0 0.0
      %1746 = vmatpush1.msra.mxu0 0.0
      %1747 = vmatprep.subr.mxu0 0.0
      %1748 = vmatpush1.msra.mxu0 0.0
      %1749 = vmatprep.subr.mxu0 0.0
      %1750 = vmatpush1.msra.mxu0 0.0
      %1751 = vmatprep.subr.mxu0 0.0
      %1752 = vmatpush1.msra.mxu0 0.0
      %1753 = vmatprep.subr.mxu0 0.0
      %1754 = vmatpush1.msra.mxu0 0.0
      %1755 = vmatprep.subr.mxu0 0.0
      %1756 = vmatpush1.msra.mxu0 0.0
      %1757 = vmatprep.subr.mxu0 0.0
      %1758 = vmatpush1.msra.mxu0 0.0
      %1759 = vmatprep.subr.mxu0 0.0
      %1760 = vmatpush1.msra.mxu0 0.0
      %1761 = vmatprep.subr.mxu0 0.0
      %1762 = vmatpush1.msra.mxu0 0.0
      %1763 = vmatprep.subr.mxu0 0.0
      %1764 = vmatpush1.msra.mxu0 0.0
      %1765 = vmatprep.subr.mxu0 0.0
      %1766 = vmatpush1.msra.mxu0 0.0
      %1767 = vmatprep.subr.mxu0 0.0
      %1768 = vmatpush1.msra.mxu0 0.0
      %1769 = vmatprep.subr.mxu0 0.0
      %1770 = vmatpush1.msra.mxu0 0.0
      %1771 = vmatprep.subr.mxu0 0.0
      %1772 = vmatpush1.msra.mxu0 0.0
      %1773 = vmatprep.subr.mxu0 0.0
      %1774 = vmatpush1.msra.mxu0 0.0
      %1775 = vmatprep.subr.mxu0 0.0
      %1776 = vmatpush1.msra.mxu0 0.0
      %1777 = vmatprep.subr.mxu0 0.0
      %1778 = vmatpush1.msra.mxu0 0.0
      %1779 = vmatprep.subr.mxu0 0.0
      %1780 = vmatpush1.msra.mxu0 0.0
      %1781 = vmatprep.subr.mxu0 0.0
      %1782 = vmatpush1.msra.mxu0 0.0
      %1783 = vmatprep.subr.mxu0 0.0
      %1784 = vmatpush1.msra.mxu0 0.0
      %1785 = vmatprep.subr.mxu0 0.0
      %1786 = vmatpush1.msra.mxu0 0.0
      %1787 = vmatprep.subr.mxu0 0.0
      %1788 = vmatpush1.msra.mxu0 0.0
      %1789 = vmatprep.subr.mxu0 0.0
      %1790 = vmatpush1.msra.mxu0 0.0
      %1791 = vmatprep.mubr.f32.mxu0 0.0
      %1792 = vmatmul.mubr.f32.gmra.mrb[0].mxu0 %v1716
      %v1793 = vpop.f32.mrb[0].mxu0
      %v1794 = vadd.f32 %v1713, %v1793
      %v1795 = vpop.f32.mrb[0].mxu0
      %1796 = vmatprep.mubr.f32.mxu0 0.0
      %1797 = vmatmul.mubr.f32.gmra.mrb[0].mxu0 %v1719
      %v1798 = vpop.f32.mrb[0].mxu0
      %v1799 = vadd.f32 %v1713, %v1798
      %v1800 = vpop.f32.mrb[0].mxu0
      %1801 = vmatprep.mubr.f32.mxu0 0.0
      %1802 = vmatmul.mubr.f32.gmra.mrb[0].mxu0 %v1722
      %v1803 = vpop.f32.mrb[0].mxu0
      %v1804 = vadd.f32 %v1713, %v1803
      %v1805 = vpop.f32.mrb[0].mxu0
      %1806 = vmatprep.mubr.f32.mxu0 0.0
      %1807 = vmatmul.mubr.f32.gmra.mrb[0].mxu0 %v1725
      %v1808 = vpop.f32.mrb[0].mxu0
      %v1809 = vadd.f32 %v1713, %v1808
      %v1810 = vpop.f32.mrb[0].mxu0
      %1811 = vdwg.mxu0
      %v1812 = vsel %vm943, %v1794, 0.0
      %1813 = vadd.xlane.f32.xlu0 %v1812
      %v1814 = vpop.xlane.xlu0 %1813
      %v1815 = vsel %vm943, %v1799, 0.0
      %1816 = vadd.xlane.f32.xlu0 %v1815
      %v1817 = vpop.xlane.xlu0 %1816
      %v1818 = vsel %vm943, %v1804, 0.0
      %1819 = vadd.xlane.f32.xlu0 %v1818
      %v1820 = vpop.xlane.xlu0 %1819
      %v1821 = vsel %vm943, %v1809, 0.0
      %1822 = vadd.xlane.f32.xlu0 %v1821
      %v1823 = vpop.xlane.xlu0 %1822
      %v1824 = vmul.f32 %v1794, %v1794
      %v1825 = vmul.f32 %v1799, %v1799
      %v1826 = vmul.f32 %v1804, %v1804
      %v1827 = vmul.f32 %v1809, %v1809
      %v1828 = vsel %vm943, %v1824, 0.0
      %1829 = vadd.xlane.f32.xlu0 %v1828
      %v1830 = vpop.xlane.xlu0 %1829
      %v1831 = vsel %vm943, %v1825, 0.0
      %1832 = vadd.xlane.f32.xlu0 %v1831
      %v1833 = vpop.xlane.xlu0 %1832
      %v1834 = vsel %vm943, %v1826, 0.0
      %1835 = vadd.xlane.f32.xlu0 %v1834
      %v1836 = vpop.xlane.xlu0 %1835
      %v1837 = vsel %vm943, %v1827, 0.0
      %1838 = vadd.xlane.f32.xlu0 %v1837
      %v1839 = vpop.xlane.xlu0 %1838
      %v1840 = vmul.f32 %v1814, 0.015625
      %v1841 = vmul.f32 %v1817, 0.015625
      %v1842 = vmul.f32 %v1820, 0.015625
      %v1843 = vmul.f32 %v1823, 0.015625
      %v1844 = vmul.f32 %v1830, 0.015625
      %v1845 = vmul.f32 %v1833, 0.015625
      %v1846 = vmul.f32 %v1836, 0.015625
      %v1847 = vmul.f32 %v1839, 0.015625
      %v1848 = vmul.f32 %v1840, %v1840
      %v1849 = vmul.f32 %v1841, %v1841
      %v1850 = vmul.f32 %v1842, %v1842
      %v1851 = vmul.f32 %v1843, %v1843
      %v1852 = vsub.f32 %v1844, %v1848
      %v1853 = vsub.f32 %v1845, %v1849
      %v1854 = vsub.f32 %v1846, %v1850
      %v1855 = vsub.f32 %v1847, %v1851
      %v1856 = vsub.f32 %v1794, %v1840
      %v1857 = vsub.f32 %v1799, %v1841
      %v1858 = vsub.f32 %v1804, %v1842
      %v1859 = vsub.f32 %v1809, %v1843
      %v1860 = vadd.f32 %v1852, 1e-05
      %v1861 = vadd.f32 %v1853, 1e-05
      %v1862 = vadd.f32 %v1854, 1e-05
      %v1863 = vadd.f32 %v1855, 1e-05
      %v1864 = vrsqrt.pop %v1860
      %v1865 = vrsqrt.pop %v1861
      %v1866 = vrsqrt.pop %v1862
      %v1867 = vrsqrt.pop %v1863
      %v1868 = vmul.f32 %v1856, %v1864
      %v1869 = vmul.f32 %v1857, %v1865
      %v1870 = vmul.f32 %v1858, %v1866
      %v1871 = vmul.f32 %v1859, %v1867
      %v1872 = vld [vmem:[%s20] sm:$0x1]
      %v1874 = vlaneseq
      %v1875 = vshrl.u32 %v1874, 7
      %v1876 = vsub.s32 0, %v1875
      %v1877 = vrot.slane %v1872, %v1876
      %v1879 = vmul.f32 %v1868, %v1877
      %v1880 = vmul.f32 %v1869, %v1877
      %v1881 = vmul.f32 %v1870, %v1877
      %v1882 = vmul.f32 %v1871, %v1877
      %v1883 = vld [vmem:[%s21] sm:$0x1]
      %v1885 = vlaneseq
      %v1886 = vshrl.u32 %v1885, 7
      %v1887 = vsub.s32 0, %v1886
      %v1888 = vrot.slane %v1883, %v1887
      %v1890 = vadd.f32 %v1879, %v1888
      %v1891 = vadd.f32 %v1880, %v1888
      %v1892 = vadd.f32 %v1881, %v1888
      %v1893 = vadd.f32 %v1882, %v1888
      %v1894 = vmax.f32 %v1890, 0.0
      %v1895 = vmax.f32 %v1891, 0.0
      %v1896 = vmax.f32 %v1892, 0.0
      %v1897 = vmax.f32 %v1893, 0.0
      %v1898 = vld [vmem:[%s22] sm:$0xff]
      %v1899 = vld [vmem:[%s22 + $0x8] sm:$0xff]
      %v1900 = vld [vmem:[%s22 + $0x10] sm:$0xff]
      %v1901 = vld [vmem:[%s22 + $0x18] sm:$0xff]
      %v1902 = vld [vmem:[%s22 + $0x20] sm:$0xff]
      %v1903 = vld [vmem:[%s22 + $0x28] sm:$0xff]
      %v1904 = vld [vmem:[%s22 + $0x30] sm:$0xff]
      %v1905 = vld [vmem:[%s22 + $0x38] sm:$0xff]
      %v1906 = vld [vmem:[%s23] sm:$0x1]
      %v1908 = vlaneseq
      %v1909 = vshrl.u32 %v1908, 7
      %v1910 = vsub.s32 0, %v1909
      %v1911 = vrot.slane %v1906, %v1910
      %v1914 = vsel %vm943, %v1894, 0
      %v1917 = vsel %vm943, %v1895, 0
      %v1920 = vsel %vm943, %v1896, 0
      %v1923 = vsel %vm943, %v1897, 0
      %1925 = vmatprep.subr.mxu0 0.0
      %1926 = vmatpush1.msra.mxu0 %v1898
      %1927 = vmatprep.subr.mxu0 0.0
      %1928 = vmatpush1.msra.mxu0 %v1899
      %1929 = vmatprep.subr.mxu0 0.0
      %1930 = vmatpush1.msra.mxu0 %v1900
      %1931 = vmatprep.subr.mxu0 0.0
      %1932 = vmatpush1.msra.mxu0 %v1901
      %1933 = vmatprep.subr.mxu0 0.0
      %1934 = vmatpush1.msra.mxu0 %v1902
      %1935 = vmatprep.subr.mxu0 0.0
      %1936 = vmatpush1.msra.mxu0 %v1903
      %1937 = vmatprep.subr.mxu0 0.0
      %1938 = vmatpush1.msra.mxu0 %v1904
      %1939 = vmatprep.subr.mxu0 0.0
      %1940 = vmatpush1.msra.mxu0 %v1905
      %1941 = vmatprep.subr.mxu0 0.0
      %1942 = vmatpush1.msra.mxu0 0.0
      %1943 = vmatprep.subr.mxu0 0.0
      %1944 = vmatpush1.msra.mxu0 0.0
      %1945 = vmatprep.subr.mxu0 0.0
      %1946 = vmatpush1.msra.mxu0 0.0
      %1947 = vmatprep.subr.mxu0 0.0
      %1948 = vmatpush1.msra.mxu0 0.0
      %1949 = vmatprep.subr.mxu0 0.0
      %1950 = vmatpush1.msra.mxu0 0.0
      %1951 = vmatprep.subr.mxu0 0.0
      %1952 = vmatpush1.msra.mxu0 0.0
      %1953 = vmatprep.subr.mxu0 0.0
      %1954 = vmatpush1.msra.mxu0 0.0
      %1955 = vmatprep.subr.mxu0 0.0
      %1956 = vmatpush1.msra.mxu0 0.0
      %1957 = vmatprep.subr.mxu0 0.0
      %1958 = vmatpush1.msra.mxu0 0.0
      %1959 = vmatprep.subr.mxu0 0.0
      %1960 = vmatpush1.msra.mxu0 0.0
      %1961 = vmatprep.subr.mxu0 0.0
      %1962 = vmatpush1.msra.mxu0 0.0
      %1963 = vmatprep.subr.mxu0 0.0
      %1964 = vmatpush1.msra.mxu0 0.0
      %1965 = vmatprep.subr.mxu0 0.0
      %1966 = vmatpush1.msra.mxu0 0.0
      %1967 = vmatprep.subr.mxu0 0.0
      %1968 = vmatpush1.msra.mxu0 0.0
      %1969 = vmatprep.subr.mxu0 0.0
      %1970 = vmatpush1.msra.mxu0 0.0
      %1971 = vmatprep.subr.mxu0 0.0
      %1972 = vmatpush1.msra.mxu0 0.0
      %1973 = vmatprep.subr.mxu0 0.0
      %1974 = vmatpush1.msra.mxu0 0.0
      %1975 = vmatprep.subr.mxu0 0.0
      %1976 = vmatpush1.msra.mxu0 0.0
      %1977 = vmatprep.subr.mxu0 0.0
      %1978 = vmatpush1.msra.mxu0 0.0
      %1979 = vmatprep.subr.mxu0 0.0
      %1980 = vmatpush1.msra.mxu0 0.0
      %1981 = vmatprep.subr.mxu0 0.0
      %1982 = vmatpush1.msra.mxu0 0.0
      %1983 = vmatprep.subr.mxu0 0.0
      %1984 = vmatpush1.msra.mxu0 0.0
      %1985 = vmatprep.subr.mxu0 0.0
      %1986 = vmatpush1.msra.mxu0 0.0
      %1987 = vmatprep.subr.mxu0 0.0
      %1988 = vmatpush1.msra.mxu0 0.0
      %1989 = vmatprep.mubr.f32.mxu0 0.0
      %1990 = vmatmul.mubr.f32.gmra.mrb[0].mxu0 %v1914
      %v1991 = vpop.f32.mrb[0].mxu0
      %v1992 = vadd.f32 %v1911, %v1991
      %v1993 = vpop.f32.mrb[0].mxu0
      %1994 = vmatprep.mubr.f32.mxu0 0.0
      %1995 = vmatmul.mubr.f32.gmra.mrb[0].mxu0 %v1917
      %v1996 = vpop.f32.mrb[0].mxu0
      %v1997 = vadd.f32 %v1911, %v1996
      %v1998 = vpop.f32.mrb[0].mxu0
      %1999 = vmatprep.mubr.f32.mxu0 0.0
      %2000 = vmatmul.mubr.f32.gmra.mrb[0].mxu0 %v1920
      %v2001 = vpop.f32.mrb[0].mxu0
      %v2002 = vadd.f32 %v1911, %v2001
      %v2003 = vpop.f32.mrb[0].mxu0
      %2004 = vmatprep.mubr.f32.mxu0 0.0
      %2005 = vmatmul.mubr.f32.gmra.mrb[0].mxu0 %v1923
      %v2006 = vpop.f32.mrb[0].mxu0
      %v2007 = vadd.f32 %v1911, %v2006
      %v2008 = vpop.f32.mrb[0].mxu0
      %2009 = vdwg.mxu0
      %2010 = vst.msk [vmem:[%s818] sm:$0xff] %vm1408, %v1992
      %2011 = vst.msk [vmem:[%s818 + $0x8] sm:$0xff] %vm1408, %v1997
      %2012 = vst.msk [vmem:[%s818 + $0x10] sm:$0xff] %vm1408, %v2002
      %2013 = vst.msk [vmem:[%s818 + $0x18] sm:$0xff] %vm1408, %v2007
      %2014 = vst.msk [vmem:[%s824] sm:$0xff] %vm845, %v1322
      %2015 = vst.msk [vmem:[%s824 + $0x8] sm:$0xff] %vm845, %v1327
      %2016 = vst.msk [vmem:[%s824 + $0x10] sm:$0xff] %vm845, %v1332
      %2017 = vst.msk [vmem:[%s824 + $0x18] sm:$0xff] %vm845, %v1337
      %s2018 = smul.u32 4, %s37
      %p2019 = scmp.lt.s32.totalorder %s2018, 15
      %s2020 = scalar_select %p2019, %s2018, 15
      %s2021 = smul.addr %s2020, 8
      %s2022 = scalar_lea.vmem %s24, %s2021
      %s2023 = smul.u32 4, %s37
      %p2024 = scmp.lt.s32.totalorder %s2023, 15
      %s2025 = scalar_select %p2024, %s2023, 15
      %s2026 = smul.addr %s2025, 8
      %s2027 = scalar_lea.vmem %s25, %s2026
      // Predicated region
      $region117: #{corruption_aware_vae_forward.1} parent=115 // pred_check
        %p2028 = pneg %p574
      $region118: #{corruption_aware_vae_forward.1} parent=115 // pred_check_branch
        %2030 = sbr.rel (%p2028) target = $region120
      $region119: #{corruption_aware_vae_forward.1} parent=115 // pred_region
        %s2031 = smul.u32 4, %s37
      $region120: #{corruption_aware_vae_forward.1} parent=115 // pred_fallthru
        _
      // Predicated region
      $region121: #{corruption_aware_vae_forward.1} parent=115 // pred_check
        %p2032 = pneg %p600
      $region122: #{corruption_aware_vae_forward.1} parent=115 // pred_check_branch
        %2034 = sbr.rel (%p2032) target = $region124
      $region123: #{corruption_aware_vae_forward.1} parent=115 // pred_region
        %s2035 = smul.u32 4, %s37
      $region124: #{corruption_aware_vae_forward.1} parent=115 // pred_fallthru
        _
    $region116: #{corruption_aware_vae_forward.1} parent=5 // pred_fallthru
      _
    %p2036 = scmp.le.s32.totalorder 2, %s32
    // Predicated region
    $region125: #{corruption_aware_vae_forward.1} parent=5 // pred_check
      %p2037 = pneg %p2036
    $region126: #{corruption_aware_vae_forward.1} parent=5 // pred_check_branch
      %2039 = sbr.rel (%p2037) target = $region128
    $region127: #{corruption_aware_vae_forward.1} parent=5 // pred_region
      %s2040 = ssub.s32 %s32, 2
      // Predicated region
      $region129: #{corruption_aware_vae_forward.1} parent=127 // pred_check
        %p2041 = pneg %p580
      $region130: #{corruption_aware_vae_forward.1} parent=127 // pred_check_branch
        %2043 = sbr.rel (%p2041) target = $region132
      $region131: #{corruption_aware_vae_forward.1} parent=127 // pred_region
        %s2044 = smul.u32 4, %s38
        %p2045 = scmp.lt.s32.totalorder %s2044, 15
        %s2046 = scalar_select %p2045, %s2044, 15
        %s2047 = smul.addr %s2046, 8
        %s2048 = scalar_lea.vmem %s24, %s2047
      $region132: #{corruption_aware_vae_forward.1} parent=127 // pred_fallthru
        _
      // Predicated region
      $region133: #{corruption_aware_vae_forward.1} parent=127 // pred_check
        %p2049 = pneg %p606
      $region134: #{corruption_aware_vae_forward.1} parent=127 // pred_check_branch
        %2051 = sbr.rel (%p2049) target = $region136
      $region135: #{corruption_aware_vae_forward.1} parent=127 // pred_region
        %s2052 = smul.u32 4, %s38
        %p2053 = scmp.lt.s32.totalorder %s2052, 15
        %s2054 = scalar_select %p2053, %s2052, 15
        %s2055 = smul.addr %s2054, 8
        %s2056 = scalar_lea.vmem %s25, %s2055
      $region136: #{corruption_aware_vae_forward.1} parent=127 // pred_fallthru
        _
    $region128: #{corruption_aware_vae_forward.1} parent=5 // pred_fallthru
      _
  $region6: #{corruption_aware_vae_forward.1} parent=0 // loop_footer
    %s36 = sadd.s32 1, %s32
  $region7: #{corruption_aware_vae_forward.1} parent=0 // loop_footer_branch
    %31 = sbr.rel target = $region3
  $region8: #{corruption_aware_vae_forward.1} parent=0 // loop_exit
    _

</llo_original>
